<compile_context>
chip_gen: v5e
topology: v5e:2x2
jax: 0.10.0
libtpu: 0.0.40
codegen_flags: <defaults>
</compile_context>

<pallas_src>
import functools
import math

import jax
import jax.numpy as jnp
from jax.experimental import pallas as pl
from jax.experimental.pallas import tpu as pltpu


def _cdiv(a, b):
    return -(-a // b)


def _round_up(v, m):
    return ((v + m - 1) // m) * m


def _vmem_limit_bytes():
    """Per-generation scoped-VMEM budget (v5e/v6e: 128 MiB physical, v7x: 64 MiB)."""
    try:
        cap = int(getattr(pltpu.get_tpu_info(), "vmem_capacity_bytes", 64 << 20))
    except Exception:              # not on a TPU (e.g. interpret mode) -> conservative
        cap = 64 << 20
    if cap >= (96 << 20):
        return 100 << 20           # v5e / v6e
    return 48 << 20                # v7x (64 MiB physical per TensorCore)


def _tile_config(n_nodes, c, m, vmem_limit):
    """Node-tile size derived from the VMEM budget and the per-row footprint."""
    # Per node-row of a phase-1 grid step:
    #   Q^T tile  bf16, double-buffered .......... 2*2*M
    #   x   tile  f32,  double-buffered .......... 2*4*C
    #   in-kernel f32 upcast of the Q^T tile ..... 4*M
    #   in-kernel x*x f32 temporary .............. 4*C
    per_row = 8 * m + 12 * c + 32
    tile_n = (vmem_limit // 2) // per_row            # ~2x headroom for the rest
    tile_n = max(128, (tile_n // 128) * 128)         # lane-aligned
    # Keep at least 2 node tiles (one per v7x TensorCore) and bound padding.
    tile_n = min(tile_n, max(128, _round_up(_cdiv(n_nodes, 2), 128)))
    nt_half = _cdiv(n_nodes, 2 * tile_n)             # node tiles per core-half
    n_pad = 2 * nt_half * tile_n
    return tile_n, nt_half, n_pad


# ----------------------------------------------------------------------------
# Phase 1: streaming reduction over nodes (outer "parallel" axis = core half)
# ----------------------------------------------------------------------------
def _phase1_kernel(x_ref, qt_ref, qtx_ref, col_ref, sx_ref, sxx_ref):
    j = pl.program_id(1)

    @pl.when(j == 0)
    def _init():
        qtx_ref[...] = jnp.zeros_like(qtx_ref)
        col_ref[...] = jnp.zeros_like(col_ref)
        sx_ref[...] = jnp.zeros_like(sx_ref)
        sxx_ref[...] = jnp.zeros_like(sxx_ref)

    x32 = x_ref[...]                                   # (Tn, C)  f32
    # bf16 is only an HBM storage format; upcast before the dot (f32 x f32 -> f32).
    qt32 = qt_ref[...].astype(jnp.float32)             # (M, Tn)  f32

    # BN1 batch statistics (zero-padded rows are a no-op).
    sx_ref[...] += jnp.sum(x32, axis=0, keepdims=True)
    sxx_ref[...] += jnp.sum(x32 * x32, axis=0, keepdims=True)
    # Q column sums for the fused column normalization.
    col_ref[...] += jnp.sum(qt32, axis=1, keepdims=True)
    # Q^T-tile @ x-tile, accumulated into the VMEM-resident f32 output block.
    qtx_ref[...] += jnp.dot(qt32, x32, preferred_element_type=jnp.float32)


# ----------------------------------------------------------------------------
# Epilogue: one-shot tiny M-sized chain (BN1 fold -> hgc1 -> ReLU -> BN2 -> hgc2)
# ----------------------------------------------------------------------------
def _epilogue_kernel(qtx_ref, col_ref, sx_ref, sxx_ref,
                     a_ref, w1_ref, b1_ref, w2_ref, b2_ref,
                     g1_ref, be1_ref, g2_ref, be2_ref,
                     h2t_ref, *, n_nodes):
    eps = jnp.float32(1e-5)
    inv_n = jnp.float32(1.0 / n_nodes)

    qtx = jnp.sum(qtx_ref[...], axis=0)         # (M, C): sum the two core-half partials
    col = jnp.sum(col_ref[...], axis=0)         # (M, 1)
    sx = jnp.sum(sx_ref[...], axis=0)           # (1, C)
    sxx = jnp.sum(sxx_ref[...], axis=0)         # (1, C)

    # BatchNorm1d(input_dim), training-mode (biased) batch statistics, folded
    # into a per-feature affine.  Variance clamped >= 0 (E[x^2]-E[x]^2 guard).
    mean1 = sx * inv_n
    var1 = jnp.maximum(sxx * inv_n - mean1 * mean1, 0.0)
    scale1 = g1_ref[...] * jax.lax.rsqrt(var1 + eps)
    shift1 = be1_ref[...] - mean1 * scale1

    # supX = norm_col_Q^T @ BN1(x)  ==  (Q^T @ x) / colsum * scale1 + shift1
    # (no guard on colsum == 0, matching the PyTorch reference).
    supX = qtx * (1.0 / col) * scale1 + shift1                     # (M, C)

    a = a_ref[...]
    z1 = jnp.dot(supX, w1_ref[...], preferred_element_type=jnp.float32) + b1_ref[...]
    h1 = jnp.maximum(jnp.dot(a, z1, preferred_element_type=jnp.float32), 0.0)

    # BatchNorm1d(hidden_dim), training-mode batch statistics.
    mean2 = jnp.mean(h1, axis=0, keepdims=True)
    cen2 = h1 - mean2
    var2 = jnp.mean(cen2 * cen2, axis=0, keepdims=True)
    h1b = cen2 * jax.lax.rsqrt(var2 + eps) * g2_ref[...] + be2_ref[...]
    # TODO(synk): F.dropout(p=0.1, training=True) is stochastic; applied as identity.

    z2 = jnp.dot(h1b, w2_ref[...], preferred_element_type=jnp.float32) + b2_ref[...]
    h2 = jnp.dot(a, z2, preferred_element_type=jnp.float32)        # (M, K)

    # Transposed so phase 2 is a plain matmul with a lane-dense (K, N) output.
    h2t_ref[...] = h2.T


# ----------------------------------------------------------------------------
# Phase 2: Y^T = h2^T @ Q^T (tiled over nodes) + softmax over classes
# ----------------------------------------------------------------------------
def _phase2_kernel(qt_ref, h2t_ref, out_ref):
    qt32 = qt_ref[...].astype(jnp.float32)                          # (M, Tn)
    y = jnp.dot(h2t_ref[...], qt32, preferred_element_type=jnp.float32)   # (K, Tn)
    y = y - jnp.max(y, axis=0, keepdims=True)
    e = jnp.exp(y)
    out_ref[...] = e / jnp.sum(e, axis=0, keepdims=True)


# ----------------------------------------------------------------------------
# Wrapper
# ----------------------------------------------------------------------------
def _prepare_qt(Q, n_pad):
    """Pad + transpose Q once, stored bf16 (halves per-call HBM reads of Q).

    Q is a registered buffer in the PyTorch module; when it is static across
    calls this prep can be hoisted out of the per-call jit entirely.
    """
    qb = Q.astype(jnp.bfloat16)          # cast BEFORE padding (halves the padded write)
    n = Q.shape[0]
    if n_pad != n:
        qb = jnp.pad(qb, ((0, n_pad - n), (0, 0)))
    return qb.T                          # (M, n_pad)


def hgnn_weight_forward(x, Q, A, params):
    h, w, c = x.shape
    n_nodes = h * w
    m = Q.shape[1]
    k = params["w2"].shape[1]

    vmem_limit = _vmem_limit_bytes()
    tile_n, nt_half, n_pad = _tile_config(n_nodes, c, m, vmem_limit)

    # x streamed directly in f32: a per-call bf16 conversion pre-pass would cost
    # more HBM traffic (read f32 + write bf16 + read bf16) than the f32 read.
    x_flat = x.reshape(n_nodes, c).astype(jnp.float32)
    if n_pad != n_nodes:
        x_flat = jnp.pad(x_flat, ((0, n_pad - n_nodes), (0, 0)))
    qt_bf = _prepare_qt(Q, n_pad)

    a32 = A.astype(jnp.float32)
    w1 = params["w1"].astype(jnp.float32)
    b1 = params["b1"].astype(jnp.float32)
    w2 = params["w2"].astype(jnp.float32)
    b2 = params["b2"].astype(jnp.float32)
    g1 = params["g1"].astype(jnp.float32)
    be1 = params["be1"].astype(jnp.float32)
    g2 = params["g2"].astype(jnp.float32)
    be2 = params["be2"].astype(jnp.float32)

    # ---- Phase 1: streaming node reduction, split across 2 core-halves ----
    qtx_p, col_p, sx_p, sxx_p = pl.pallas_call(
        _phase1_kernel,
        out_shape=(
            jax.ShapeDtypeStruct((2, m, c), jnp.float32),
            jax.ShapeDtypeStruct((2, m, 1), jnp.float32),
            jax.ShapeDtypeStruct((2, 1, c), jnp.float32),
            jax.ShapeDtypeStruct((2, 1, c), jnp.float32),
        ),
        grid=(2, nt_half),
        in_specs=[
            pl.BlockSpec((tile_n, c), lambda p, j: (p * nt_half + j, 0)),   # x
            pl.BlockSpec((m, tile_n), lambda p, j: (0, p * nt_half + j)),   # Q^T
        ],
        out_specs=(
            pl.BlockSpec((None, m, c), lambda p, j: (p, 0, 0)),
            pl.BlockSpec((None, m, 1), lambda p, j: (p, 0, 0)),
            pl.BlockSpec((None, 1, c), lambda p, j: (p, 0, 0)),
            pl.BlockSpec((None, 1, c), lambda p, j: (p, 0, 0)),
        ),
        compiler_params=pltpu.CompilerParams(
            dimension_semantics=("parallel", "arbitrary"),
            vmem_limit_bytes=vmem_limit),
    )(x_flat, qt_bf)

    # ---- Epilogue: tiny M-sized chain (single step, everything in VMEM) ----
    h2t = pl.pallas_call(
        functools.partial(_epilogue_kernel, n_nodes=n_nodes),
        out_shape=jax.ShapeDtypeStruct((k, m), jnp.float32),
        compiler_params=pltpu.CompilerParams(vmem_limit_bytes=vmem_limit),
    )(qtx_p, col_p, sx_p, sxx_p, a32, w1, b1, w2, b2, g1, be1, g2, be2)

    # ---- Phase 2: Y^T = h2^T @ Q^T + softmax, node-parallel, lane-dense ----
    y_t = pl.pallas_call(
        _phase2_kernel,
        out_shape=jax.ShapeDtypeStruct((k, n_pad), jnp.float32),
        grid=(2 * nt_half,),
        in_specs=[
            pl.BlockSpec((m, tile_n), lambda i: (0, i)),   # Q^T
            pl.BlockSpec((k, m), lambda i: (0, 0)),        # h2^T
        ],
        out_specs=pl.BlockSpec((k, tile_n), lambda i: (0, i)),
        compiler_params=pltpu.CompilerParams(
            dimension_semantics=("parallel",),
            vmem_limit_bytes=vmem_limit),
    )(qt_bf, h2t)

    return y_t[:, :n_nodes].T                              # (N, K)


# ----------------------------------------------------------------------------
# Parameters / references
# ----------------------------------------------------------------------------
def init_params(key, input_dim, hidden_dim, num_classes):
    """Matches HGNN_conv.reset_parameters / BatchNorm1d defaults."""
    k1, k2, k3, k4 = jax.random.split(key, 4)
    stdv1 = 1.0 / math.sqrt(hidden_dim)
    stdv2 = 1.0 / math.sqrt(num_classes)
    return dict(
        w1=jax.random.uniform(k1, (input_dim, hidden_dim), jnp.float32, -stdv1, stdv1),
        b1=jax.random.uniform(k2, (1, hidden_dim), jnp.float32, -stdv1, stdv1),
        w2=jax.random.uniform(k3, (hidden_dim, num_classes), jnp.float32, -stdv2, stdv2),
        b2=jax.random.uniform(k4, (1, num_classes), jnp.float32, -stdv2, stdv2),
        g1=jnp.ones((1, input_dim), jnp.float32),
        be1=jnp.zeros((1, input_dim), jnp.float32),
        g2=jnp.ones((1, hidden_dim), jnp.float32),
        be2=jnp.zeros((1, hidden_dim), jnp.float32),
    )
    # NOTE: self.lin = nn.Linear(64, num_classes) is never used in forward(); omitted.


def reference_policy(x, Q, A, p, eps=1e-5):
    """Pure-JAX mirror of the kernel algebra (Q stored bf16, all math in f32)."""
    hh, ww, c = x.shape
    hi = jax.lax.Precision.HIGHEST
    xf = x.reshape(hh * ww, c).astype(jnp.float32)
    qf = Q.astype(jnp.bfloat16).astype(jnp.float32)
    mean1 = jnp.mean(xf, axis=0, keepdims=True)
    var1 = jnp.maximum(jnp.mean(xf * xf, axis=0, keepdims=True) - mean1 * mean1, 0.0)
    scale1 = p["g1"] * jax.lax.rsqrt(var1 + eps)
    shift1 = p["be1"] - mean1 * scale1
    qtx = jnp.dot(qf.T, xf, precision=hi)
    col = jnp.sum(qf, axis=0, keepdims=True).T
    supX = qtx / col * scale1 + shift1
    h1 = jnp.maximum(
        jnp.dot(A, jnp.dot(supX, p["w1"], precision=hi) + p["b1"], precision=hi), 0.0)
    m2 = jnp.mean(h1, axis=0, keepdims=True)
    c2 = h1 - m2
    v2 = jnp.mean(c2 * c2, axis=0, keepdims=True)
    h1b = c2 * jax.lax.rsqrt(v2 + eps) * p["g2"] + p["be2"]
    h2 = jnp.dot(A, jnp.dot(h1b, p["w2"], precision=hi) + p["b2"], precision=hi)
    y = jnp.dot(qf, h2, precision=hi)
    return jax.nn.softmax(y, axis=-1)


def reference_forward_f32(x, Q, A, p, eps=1e-5):
    """Full-f32 PyTorch-order reference (dropout as identity) — gross sanity check."""
    hh, ww, c = x.shape
    hi = jax.lax.Precision.HIGHEST
    xf = x.reshape(hh * ww, c)
    m1 = xf.mean(0, keepdims=True)
    v1 = ((xf - m1) ** 2).mean(0, keepdims=True)
    xbn = (xf - m1) / jnp.sqrt(v1 + eps) * p["g1"] + p["be1"]
    qn = Q / jnp.sum(Q, 0, keepdims=True)
    s = jnp.dot(qn.T, xbn, precision=hi)
    s = jnp.dot(A, jnp.dot(s, p["w1"], precision=hi) + p["b1"], precision=hi)
    s = jnp.maximum(s, 0.0)
    m2 = s.mean(0, keepdims=True)
    v2 = ((s - m2) ** 2).mean(0, keepdims=True)
    s = (s - m2) / jnp.sqrt(v2 + eps) * p["g2"] + p["be2"]
    s = jnp.dot(A, jnp.dot(s, p["w2"], precision=hi) + p["b2"], precision=hi)
    return jax.nn.softmax(jnp.dot(Q, s, precision=hi), -1)


if __name__ == "__main__":
    key = jax.random.PRNGKey(0)
    h, w, c = 8, 8, 16          # x: (h, w, c) -> N = 64 nodes, input_dim = 16
    M = 32                      # superpixels / hyperedges
    hidden_dim, num_classes = 32, 8

    kx, kq, ka, kp = jax.random.split(key, 4)
    x = jax.random.normal(kx, (h, w, c), jnp.float32)
    Q = jax.random.uniform(kq, (h * w, M), jnp.float32, minval=0.1, maxval=1.0)
    A = jax.random.uniform(ka, (M, M), jnp.float32, minval=0.0, maxval=1.0)
    params = init_params(kp, c, hidden_dim, num_classes)

    fwd = jax.jit(hgnn_weight_forward)
    out = jax.block_until_ready(fwd(x, Q, A, params))

    assert out.shape == (h * w, num_classes), out.shape
    assert bool(jnp.all(jnp.isfinite(out)))

    ref_pol = reference_policy(x, Q, A, params)
    ref_f32 = reference_forward_f32(x, Q, A, params)

    err_pol = float(jnp.max(jnp.abs(out - ref_pol)))
    err_f32 = float(jnp.max(jnp.abs(out - ref_f32)))
    row_err = float(jnp.max(jnp.abs(jnp.sum(out, axis=-1) - 1.0)))

    # Tight check vs the precision-policy-matched reference (validates tiling/algebra);
    # loose gross-structure check vs the full-f32 reference (Q bf16 quantization).
    assert err_pol < 2e-2, f"policy-matched reference mismatch: {err_pol}"
    assert row_err < 1e-2, f"softmax rows do not sum to 1: {row_err}"
    assert err_f32 < 0.5, f"gross mismatch vs f32 reference: {err_f32}"

    print("KERNEL_OK")
</pallas_src>

<mosaic_0001>
module attributes {stable_mosaic.version = 11 : i64} {
  func.func @_phase1_kernel(%arg0: i32, %arg1: i32, %arg2: memref<128x16xf32, #tpu.memory_space<vmem>>, %arg3: memref<32x128xbf16, #tpu.memory_space<vmem>>, %arg4: memref<1x32x16xf32, #tpu.memory_space<vmem>>, %arg5: memref<1x32x1xf32, #tpu.memory_space<vmem>>, %arg6: memref<1x1x16xf32, #tpu.memory_space<vmem>>, %arg7: memref<1x1x16xf32, #tpu.memory_space<vmem>>) attributes {dimension_semantics = [#tpu.dimension_semantics<parallel>, #tpu.dimension_semantics<arbitrary>], iteration_bounds = array<i64: 2, 1>, scalar_prefetch = 0 : i64, scratch_operands = 0 : i64, tpu.core_type = #tpu.core_type<tc>, window_params = [{transform_indices = @transform_0, window_bounds = array<i64: 128, 16>}, {transform_indices = @transform_1, window_bounds = array<i64: 32, 128>}, {transform_indices = @transform_2, window_bounds = array<i64: 1, 32, 16>}, {transform_indices = @transform_3, window_bounds = array<i64: 1, 32, 1>}, {transform_indices = @transform_4, window_bounds = array<i64: 1, 1, 16>}, {transform_indices = @transform_5, window_bounds = array<i64: 1, 1, 16>}]} {
    %c0_i32 = arith.constant 0 : i32
    %0 = arith.cmpi eq, %arg1, %c0_i32 : i32
    %1 = arith.extui %0 : i1 to i32
    %c0_i32_0 = arith.constant 0 : i32
    %2 = arith.cmpi ne, %1, %c0_i32_0 : i32
    scf.if %2 {
      %cst_31 = arith.constant 0.000000e+00 : f32
      %38 = vector.broadcast %cst_31 : f32 to vector<32x16xf32>
      %c0_32 = arith.constant 0 : index
      %c0_33 = arith.constant 0 : index
      %c0_34 = arith.constant 0 : index
      %39 = vector.load %arg4[%c0_32, %c0_33, %c0_34] : memref<1x32x16xf32, #tpu.memory_space<vmem>>, vector<1x32x16xf32>
      %40 = vector.shape_cast %39 : vector<1x32x16xf32> to vector<32x16xf32>
      %41 = vector.shape_cast %38 : vector<32x16xf32> to vector<1x32x16xf32>
      tpu.vector_store %arg4[%c0_32, %c0_33, %c0_34], %41 {strides = array<i32>} : memref<1x32x16xf32, #tpu.memory_space<vmem>>, vector<1x32x16xf32>,
      %cst_35 = arith.constant 0.000000e+00 : f32
      %42 = vector.broadcast %cst_35 : f32 to vector<32x1xf32>
      %c0_36 = arith.constant 0 : index
      %c0_37 = arith.constant 0 : index
      %c0_38 = arith.constant 0 : index
      %43 = vector.load %arg5[%c0_36, %c0_37, %c0_38] : memref<1x32x1xf32, #tpu.memory_space<vmem>>, vector<1x32x1xf32>
      %44 = vector.shape_cast %43 : vector<1x32x1xf32> to vector<32x1xf32>
      %45 = vector.shape_cast %42 : vector<32x1xf32> to vector<1x32x1xf32>
      tpu.vector_store %arg5[%c0_36, %c0_37, %c0_38], %45 {strides = array<i32>} : memref<1x32x1xf32, #tpu.memory_space<vmem>>, vector<1x32x1xf32>,
      %cst_39 = arith.constant 0.000000e+00 : f32
      %46 = vector.broadcast %cst_39 : f32 to vector<1x16xf32>
      %c0_40 = arith.constant 0 : index
      %c0_41 = arith.constant 0 : index
      %c0_42 = arith.constant 0 : index
      %47 = vector.load %arg6[%c0_40, %c0_41, %c0_42] : memref<1x1x16xf32, #tpu.memory_space<vmem>>, vector<1x1x16xf32>
      %48 = vector.shape_cast %47 : vector<1x1x16xf32> to vector<1x16xf32>
      %49 = vector.shape_cast %46 : vector<1x16xf32> to vector<1x1x16xf32>
      tpu.vector_store %arg6[%c0_40, %c0_41, %c0_42], %49 {strides = array<i32>} : memref<1x1x16xf32, #tpu.memory_space<vmem>>, vector<1x1x16xf32>,
      %cst_43 = arith.constant 0.000000e+00 : f32
      %50 = vector.broadcast %cst_43 : f32 to vector<1x16xf32>
      %c0_44 = arith.constant 0 : index
      %c0_45 = arith.constant 0 : index
      %c0_46 = arith.constant 0 : index
      %51 = vector.load %arg7[%c0_44, %c0_45, %c0_46] : memref<1x1x16xf32, #tpu.memory_space<vmem>>, vector<1x1x16xf32>
      %52 = vector.shape_cast %51 : vector<1x1x16xf32> to vector<1x16xf32>
      %53 = vector.shape_cast %50 : vector<1x16xf32> to vector<1x1x16xf32>
      tpu.vector_store %arg7[%c0_44, %c0_45, %c0_46], %53 {strides = array<i32>} : memref<1x1x16xf32, #tpu.memory_space<vmem>>, vector<1x1x16xf32>,
    } else {
    }
    %c0 = arith.constant 0 : index
    %c0_1 = arith.constant 0 : index
    %3 = vector.load %arg2[%c0, %c0_1] : memref<128x16xf32, #tpu.memory_space<vmem>>, vector<128x16xf32>
    %c0_2 = arith.constant 0 : index
    %c0_3 = arith.constant 0 : index
    %4 = vector.load %arg3[%c0_2, %c0_3] : memref<32x128xbf16, #tpu.memory_space<vmem>>, vector<32x128xbf16>
    %5 = arith.extf %4 : vector<32x128xbf16> to vector<32x128xf32>
    %c0_4 = arith.constant 0 : index
    %c0_5 = arith.constant 0 : index
    %c0_6 = arith.constant 0 : index
    %6 = vector.load %arg6[%c0_4, %c0_5, %c0_6] : memref<1x1x16xf32, #tpu.memory_space<vmem>>, vector<1x1x16xf32>
    %7 = vector.shape_cast %6 : vector<1x1x16xf32> to vector<1x16xf32>
    %cst = arith.constant dense<0.000000e+00> : vector<16xf32>
    %8 = vector.multi_reduction <add>, %3, %cst [0] : vector<128x16xf32> to vector<16xf32>
    %9 = vector.shape_cast %8 : vector<16xf32> to vector<1x16xf32>
    %10 = arith.addf %7, %9 : vector<1x16xf32>
    %c0_7 = arith.constant 0 : index
    %c0_8 = arith.constant 0 : index
    %c0_9 = arith.constant 0 : index
    %11 = vector.load %arg6[%c0_7, %c0_8, %c0_9] : memref<1x1x16xf32, #tpu.memory_space<vmem>>, vector<1x1x16xf32>
    %12 = vector.shape_cast %11 : vector<1x1x16xf32> to vector<1x16xf32>
    %13 = vector.shape_cast %10 : vector<1x16xf32> to vector<1x1x16xf32>
    tpu.vector_store %arg6[%c0_7, %c0_8, %c0_9], %13 {strides = array<i32>} : memref<1x1x16xf32, #tpu.memory_space<vmem>>, vector<1x1x16xf32>,
    %c0_10 = arith.constant 0 : index
    %c0_11 = arith.constant 0 : index
    %c0_12 = arith.constant 0 : index
    %14 = vector.load %arg7[%c0_10, %c0_11, %c0_12] : memref<1x1x16xf32, #tpu.memory_space<vmem>>, vector<1x1x16xf32>
    %15 = vector.shape_cast %14 : vector<1x1x16xf32> to vector<1x16xf32>
    %16 = arith.mulf %3, %3 : vector<128x16xf32>
    %cst_13 = arith.constant dense<0.000000e+00> : vector<16xf32>
    %17 = vector.multi_reduction <add>, %16, %cst_13 [0] : vector<128x16xf32> to vector<16xf32>
    %18 = vector.shape_cast %17 : vector<16xf32> to vector<1x16xf32>
    %19 = arith.addf %15, %18 : vector<1x16xf32>
    %c0_14 = arith.constant 0 : index
    %c0_15 = arith.constant 0 : index
    %c0_16 = arith.constant 0 : index
    %20 = vector.load %arg7[%c0_14, %c0_15, %c0_16] : memref<1x1x16xf32, #tpu.memory_space<vmem>>, vector<1x1x16xf32>
    %21 = vector.shape_cast %20 : vector<1x1x16xf32> to vector<1x16xf32>
    %22 = vector.shape_cast %19 : vector<1x16xf32> to vector<1x1x16xf32>
    tpu.vector_store %arg7[%c0_14, %c0_15, %c0_16], %22 {strides = array<i32>} : memref<1x1x16xf32, #tpu.memory_space<vmem>>, vector<1x1x16xf32>,
    %c0_17 = arith.constant 0 : index
    %c0_18 = arith.constant 0 : index
    %c0_19 = arith.constant 0 : index
    %23 = vector.load %arg5[%c0_17, %c0_18, %c0_19] : memref<1x32x1xf32, #tpu.memory_space<vmem>>, vector<1x32x1xf32>
    %24 = vector.shape_cast %23 : vector<1x32x1xf32> to vector<32x1xf32>
    %cst_20 = arith.constant dense<0.000000e+00> : vector<32xf32>
    %25 = vector.multi_reduction <add>, %5, %cst_20 [1] : vector<32x128xf32> to vector<32xf32>
    %26 = vector.shape_cast %25 : vector<32xf32> to vector<32x1xf32>
    %27 = arith.addf %24, %26 : vector<32x1xf32>
    %c0_21 = arith.constant 0 : index
    %c0_22 = arith.constant 0 : index
    %c0_23 = arith.constant 0 : index
    %28 = vector.load %arg5[%c0_21, %c0_22, %c0_23] : memref<1x32x1xf32, #tpu.memory_space<vmem>>, vector<1x32x1xf32>
    %29 = vector.shape_cast %28 : vector<1x32x1xf32> to vector<32x1xf32>
    %30 = vector.shape_cast %27 : vector<32x1xf32> to vector<1x32x1xf32>
    tpu.vector_store %arg5[%c0_21, %c0_22, %c0_23], %30 {strides = array<i32>} : memref<1x32x1xf32, #tpu.memory_space<vmem>>, vector<1x32x1xf32>,
    %c0_24 = arith.constant 0 : index
    %c0_25 = arith.constant 0 : index
    %c0_26 = arith.constant 0 : index
    %31 = vector.load %arg4[%c0_24, %c0_25, %c0_26] : memref<1x32x16xf32, #tpu.memory_space<vmem>>, vector<1x32x16xf32>
    %32 = vector.shape_cast %31 : vector<1x32x16xf32> to vector<32x16xf32>
    %cst_27 = arith.constant dense<0.000000e+00> : vector<32x16xf32>
    %33 = tpu.matmul %5, %3, %cst_27 {dimension_numbers = #tpu.dot_dimension_numbers<[1], [0], [0], [1], [0, 0, 1, 1], [], []>} : vector<32x128xf32>, vector<128x16xf32>, vector<32x16xf32> -> vector<32x16xf32>
    %34 = arith.addf %32, %33 : vector<32x16xf32>
    %c0_28 = arith.constant 0 : index
    %c0_29 = arith.constant 0 : index
    %c0_30 = arith.constant 0 : index
    %35 = vector.load %arg4[%c0_28, %c0_29, %c0_30] : memref<1x32x16xf32, #tpu.memory_space<vmem>>, vector<1x32x16xf32>
    %36 = vector.shape_cast %35 : vector<1x32x16xf32> to vector<32x16xf32>
    %37 = vector.shape_cast %34 : vector<32x16xf32> to vector<1x32x16xf32>
    tpu.vector_store %arg4[%c0_28, %c0_29, %c0_30], %37 {strides = array<i32>} : memref<1x32x16xf32, #tpu.memory_space<vmem>>, vector<1x32x16xf32>,
    return
  }
  func.func @transform_0(%arg0: i32, %arg1: i32) -> (i32, i32) {
    %c1_i32 = arith.constant 1 : i32
    %0 = arith.muli %arg0, %c1_i32 : i32
    %1 = arith.addi %0, %arg1 : i32
    %c0_i32 = arith.constant 0 : i32
    %c0_i32_0 = arith.constant 0 : i32
    return %1, %c0_i32 : i32, i32
  }
  func.func @transform_1(%arg0: i32, %arg1: i32) -> (i32, i32) {
    %c1_i32 = arith.constant 1 : i32
    %0 = arith.muli %arg0, %c1_i32 : i32
    %1 = arith.addi %0, %arg1 : i32
    %c0_i32 = arith.constant 0 : i32
    %c0_i32_0 = arith.constant 0 : i32
    return %c0_i32, %1 : i32, i32
  }
  func.func @transform_2(%arg0: i32, %arg1: i32) -> (i32, i32, i32) {
    %c0_i32 = arith.constant 0 : i32
    %c0_i32_0 = arith.constant 0 : i32
    %c0_i32_1 = arith.constant 0 : i32
    return %arg0, %c0_i32, %c0_i32_0 : i32, i32, i32
  }
  func.func @transform_3(%arg0: i32, %arg1: i32) -> (i32, i32, i32) {
    %c0_i32 = arith.constant 0 : i32
    %c0_i32_0 = arith.constant 0 : i32
    %c0_i32_1 = arith.constant 0 : i32
    return %arg0, %c0_i32, %c0_i32_0 : i32, i32, i32
  }
  func.func @transform_4(%arg0: i32, %arg1: i32) -> (i32, i32, i32) {
    %c0_i32 = arith.constant 0 : i32
    %c0_i32_0 = arith.constant 0 : i32
    %c0_i32_1 = arith.constant 0 : i32
    return %arg0, %c0_i32, %c0_i32_0 : i32, i32, i32
  }
  func.func @transform_5(%arg0: i32, %arg1: i32) -> (i32, i32, i32) {
    %c0_i32 = arith.constant 0 : i32
    %c0_i32_0 = arith.constant 0 : i32
    %c0_i32_1 = arith.constant 0 : i32
    return %arg0, %c0_i32, %c0_i32_0 : i32, i32, i32
  }
}

module attributes {stable_mosaic.version = 11 : i64} {
  func.func @_epilogue_kernel(%arg0: memref<2x32x16xf32, #tpu.memory_space<vmem>>, %arg1: memref<2x32x1xf32, #tpu.memory_space<vmem>>, %arg2: memref<2x1x16xf32, #tpu.memory_space<vmem>>, %arg3: memref<2x1x16xf32, #tpu.memory_space<vmem>>, %arg4: memref<32x32xf32, #tpu.memory_space<vmem>>, %arg5: memref<16x32xf32, #tpu.memory_space<vmem>>, %arg6: memref<1x32xf32, #tpu.memory_space<vmem>>, %arg7: memref<32x8xf32, #tpu.memory_space<vmem>>, %arg8: memref<1x8xf32, #tpu.memory_space<vmem>>, %arg9: memref<1x16xf32, #tpu.memory_space<vmem>>, %arg10: memref<1x16xf32, #tpu.memory_space<vmem>>, %arg11: memref<1x32xf32, #tpu.memory_space<vmem>>, %arg12: memref<1x32xf32, #tpu.memory_space<vmem>>, %arg13: memref<8x32xf32, #tpu.memory_space<vmem>>) attributes {dimension_semantics = [], scalar_prefetch = 0 : i64, scratch_operands = 0 : i64, tpu.core_type = #tpu.core_type<tc>} {
    %c0 = arith.constant 0 : index
    %c0_0 = arith.constant 0 : index
    %c0_1 = arith.constant 0 : index
    %0 = vector.load %arg0[%c0, %c0_0, %c0_1] : memref<2x32x16xf32, #tpu.memory_space<vmem>>, vector<2x32x16xf32>
    %cst = arith.constant dense<0.000000e+00> : vector<32x16xf32>
    %1 = vector.multi_reduction <add>, %0, %cst [0] : vector<2x32x16xf32> to vector<32x16xf32>
    %c0_2 = arith.constant 0 : index
    %c0_3 = arith.constant 0 : index
    %c0_4 = arith.constant 0 : index
    %2 = vector.load %arg1[%c0_2, %c0_3, %c0_4] : memref<2x32x1xf32, #tpu.memory_space<vmem>>, vector<2x32x1xf32>
    %cst_5 = arith.constant dense<0.000000e+00> : vector<32x1xf32>
    %3 = vector.multi_reduction <add>, %2, %cst_5 [0] : vector<2x32x1xf32> to vector<32x1xf32>
    %c0_6 = arith.constant 0 : index
    %c0_7 = arith.constant 0 : index
    %c0_8 = arith.constant 0 : index
    %4 = vector.load %arg2[%c0_6, %c0_7, %c0_8] : memref<2x1x16xf32, #tpu.memory_space<vmem>>, vector<2x1x16xf32>
    %cst_9 = arith.constant dense<0.000000e+00> : vector<1x16xf32>
    %5 = vector.multi_reduction <add>, %4, %cst_9 [0] : vector<2x1x16xf32> to vector<1x16xf32>
    %c0_10 = arith.constant 0 : index
    %c0_11 = arith.constant 0 : index
    %c0_12 = arith.constant 0 : index
    %6 = vector.load %arg3[%c0_10, %c0_11, %c0_12] : memref<2x1x16xf32, #tpu.memory_space<vmem>>, vector<2x1x16xf32>
    %cst_13 = arith.constant dense<0.000000e+00> : vector<1x16xf32>
    %7 = vector.multi_reduction <add>, %6, %cst_13 [0] : vector<2x1x16xf32> to vector<1x16xf32>
    %cst_14 = arith.constant 1.562500e-02 : f32
    %8 = vector.broadcast %cst_14 : f32 to vector<1x16xf32>
    %9 = arith.mulf %5, %8 : vector<1x16xf32>
    %cst_15 = arith.constant 1.562500e-02 : f32
    %10 = vector.broadcast %cst_15 : f32 to vector<1x16xf32>
    %11 = arith.mulf %7, %10 : vector<1x16xf32>
    %12 = arith.mulf %9, %9 : vector<1x16xf32>
    %13 = arith.subf %11, %12 : vector<1x16xf32>
    %cst_16 = arith.constant 0.000000e+00 : f32
    %14 = vector.broadcast %cst_16 : f32 to vector<1x16xf32>
    %15 = arith.maximumf %13, %14 : vector<1x16xf32>
    %c0_17 = arith.constant 0 : index
    %c0_18 = arith.constant 0 : index
    %16 = vector.load %arg9[%c0_17, %c0_18] : memref<1x16xf32, #tpu.memory_space<vmem>>, vector<1x16xf32>
    %cst_19 = arith.constant 9.99999974E-6 : f32
    %17 = vector.broadcast %cst_19 : f32 to vector<1x16xf32>
    %18 = arith.addf %15, %17 : vector<1x16xf32>
    %19 = math.rsqrt %18 : vector<1x16xf32>
    %20 = arith.mulf %16, %19 : vector<1x16xf32>
    %c0_20 = arith.constant 0 : index
    %c0_21 = arith.constant 0 : index
    %21 = vector.load %arg10[%c0_20, %c0_21] : memref<1x16xf32, #tpu.memory_space<vmem>>, vector<1x16xf32>
    %22 = arith.mulf %9, %20 : vector<1x16xf32>
    %23 = arith.subf %21, %22 : vector<1x16xf32>
    %cst_22 = arith.constant 1.000000e+00 : f32
    %24 = vector.broadcast %cst_22 : f32 to vector<32x1xf32>
    %25 = arith.divf %24, %3 : vector<32x1xf32>
    %26 = vector.broadcast %25 : vector<32x1xf32> to vector<32x16xf32>
    %27 = arith.mulf %1, %26 : vector<32x16xf32>
    %28 = vector.broadcast %20 : vector<1x16xf32> to vector<32x16xf32>
    %29 = arith.mulf %27, %28 : vector<32x16xf32>
    %30 = vector.broadcast %23 : vector<1x16xf32> to vector<32x16xf32>
    %31 = arith.addf %29, %30 : vector<32x16xf32>
    %c0_23 = arith.constant 0 : index
    %c0_24 = arith.constant 0 : index
    %32 = vector.load %arg4[%c0_23, %c0_24] : memref<32x32xf32, #tpu.memory_space<vmem>>, vector<32x32xf32>
    %c0_25 = arith.constant 0 : index
    %c0_26 = arith.constant 0 : index
    %33 = vector.load %arg5[%c0_25, %c0_26] : memref<16x32xf32, #tpu.memory_space<vmem>>, vector<16x32xf32>
    %cst_27 = arith.constant dense<0.000000e+00> : vector<32x32xf32>
    %34 = tpu.matmul %31, %33, %cst_27 {dimension_numbers = #tpu.dot_dimension_numbers<[1], [0], [0], [1], [0, 0, 1, 1], [], []>} : vector<32x16xf32>, vector<16x32xf32>, vector<32x32xf32> -> vector<32x32xf32>
    %c0_28 = arith.constant 0 : index
    %c0_29 = arith.constant 0 : index
    %35 = vector.load %arg6[%c0_28, %c0_29] : memref<1x32xf32, #tpu.memory_space<vmem>>, vector<1x32xf32>
    %36 = vector.broadcast %35 : vector<1x32xf32> to vector<32x32xf32>
    %37 = arith.addf %34, %36 : vector<32x32xf32>
    %cst_30 = arith.constant dense<0.000000e+00> : vector<32x32xf32>
    %38 = tpu.matmul %32, %37, %cst_30 {dimension_numbers = #tpu.dot_dimension_numbers<[1], [0], [0], [1], [0, 0, 1, 1], [], []>} : vector<32x32xf32>, vector<32x32xf32>, vector<32x32xf32> -> vector<32x32xf32>
    %cst_31 = arith.constant 0.000000e+00 : f32
    %39 = vector.broadcast %cst_31 : f32 to vector<32x32xf32>
    %40 = arith.maximumf %38, %39 : vector<32x32xf32>
    %cst_32 = arith.constant dense<0.000000e+00> : vector<32xf32>
    %41 = vector.multi_reduction <add>, %40, %cst_32 [0] : vector<32x32xf32> to vector<32xf32>
    %42 = vector.shape_cast %41 : vector<32xf32> to vector<1x32xf32>
    %cst_33 = arith.constant 3.200000e+01 : f32
    %43 = vector.broadcast %cst_33 : f32 to vector<1x32xf32>
    %44 = arith.divf %42, %43 : vector<1x32xf32>
    %45 = vector.broadcast %44 : vector<1x32xf32> to vector<32x32xf32>
    %46 = arith.subf %40, %45 : vector<32x32xf32>
    %47 = arith.mulf %46, %46 : vector<32x32xf32>
    %cst_34 = arith.constant dense<0.000000e+00> : vector<32xf32>
    %48 = vector.multi_reduction <add>, %47, %cst_34 [0] : vector<32x32xf32> to vector<32xf32>
    %49 = vector.shape_cast %48 : vector<32xf32> to vector<1x32xf32>
    %cst_35 = arith.constant 3.200000e+01 : f32
    %50 = vector.broadcast %cst_35 : f32 to vector<1x32xf32>
    %51 = arith.divf %49, %50 : vector<1x32xf32>
    %cst_36 = arith.constant 9.99999974E-6 : f32
    %52 = vector.broadcast %cst_36 : f32 to vector<1x32xf32>
    %53 = arith.addf %51, %52 : vector<1x32xf32>
    %54 = math.rsqrt %53 : vector<1x32xf32>
    %55 = vector.broadcast %54 : vector<1x32xf32> to vector<32x32xf32>
    %56 = arith.mulf %46, %55 : vector<32x32xf32>
    %c0_37 = arith.constant 0 : index
    %c0_38 = arith.constant 0 : index
    %57 = vector.load %arg11[%c0_37, %c0_38] : memref<1x32xf32, #tpu.memory_space<vmem>>, vector<1x32xf32>
    %58 = vector.broadcast %57 : vector<1x32xf32> to vector<32x32xf32>
    %59 = arith.mulf %56, %58 : vector<32x32xf32>
    %c0_39 = arith.constant 0 : index
    %c0_40 = arith.constant 0 : index
    %60 = vector.load %arg12[%c0_39, %c0_40] : memref<1x32xf32, #tpu.memory_space<vmem>>, vector<1x32xf32>
    %61 = vector.broadcast %60 : vector<1x32xf32> to vector<32x32xf32>
    %62 = arith.addf %59, %61 : vector<32x32xf32>
    %c0_41 = arith.constant 0 : index
    %c0_42 = arith.constant 0 : index
    %63 = vector.load %arg7[%c0_41, %c0_42] : memref<32x8xf32, #tpu.memory_space<vmem>>, vector<32x8xf32>
    %cst_43 = arith.constant dense<0.000000e+00> : vector<32x8xf32>
    %64 = tpu.matmul %62, %63, %cst_43 {dimension_numbers = #tpu.dot_dimension_numbers<[1], [0], [0], [1], [0, 0, 1, 1], [], []>} : vector<32x32xf32>, vector<32x8xf32>, vector<32x8xf32> -> vector<32x8xf32>
    %c0_44 = arith.constant 0 : index
    %c0_45 = arith.constant 0 : index
    %65 = vector.load %arg8[%c0_44, %c0_45] : memref<1x8xf32, #tpu.memory_space<vmem>>, vector<1x8xf32>
    %66 = vector.broadcast %65 : vector<1x8xf32> to vector<32x8xf32>
    %67 = arith.addf %64, %66 : vector<32x8xf32>
    %cst_46 = arith.constant dense<0.000000e+00> : vector<32x8xf32>
    %68 = tpu.matmul %32, %67, %cst_46 {dimension_numbers = #tpu.dot_dimension_numbers<[1], [0], [0], [1], [0, 0, 1, 1], [], []>} : vector<32x32xf32>, vector<32x8xf32>, vector<32x8xf32> -> vector<32x8xf32>
    %69 = tpu.transpose %68, [1, 0] : vector<32x8xf32> -> vector<8x32xf32>
    %c0_47 = arith.constant 0 : index
    %c0_48 = arith.constant 0 : index
    %70 = vector.load %arg13[%c0_47, %c0_48] : memref<8x32xf32, #tpu.memory_space<vmem>>, vector<8x32xf32>
    tpu.vector_store %arg13[%c0_47, %c0_48], %69 {strides = array<i32>} : memref<8x32xf32, #tpu.memory_space<vmem>>, vector<8x32xf32>,
    return
  }
}

module attributes {stable_mosaic.version = 11 : i64} {
  func.func @_phase2_kernel(%arg0: i32, %arg1: memref<32x128xbf16, #tpu.memory_space<vmem>>, %arg2: memref<8x32xf32, #tpu.memory_space<vmem>>, %arg3: memref<8x128xf32, #tpu.memory_space<vmem>>) attributes {dimension_semantics = [#tpu.dimension_semantics<parallel>], iteration_bounds = array<i64: 2>, scalar_prefetch = 0 : i64, scratch_operands = 0 : i64, tpu.core_type = #tpu.core_type<tc>, window_params = [{transform_indices = @transform_0, window_bounds = array<i64: 32, 128>}, {pipeline_mode = #tpu.pipeline_mode<synchronous>, transform_indices = @transform_1, window_bounds = array<i64: 8, 32>}, {transform_indices = @transform_2, window_bounds = array<i64: 8, 128>}]} {
    %c0 = arith.constant 0 : index
    %c0_0 = arith.constant 0 : index
    %0 = vector.load %arg1[%c0, %c0_0] : memref<32x128xbf16, #tpu.memory_space<vmem>>, vector<32x128xbf16>
    %1 = arith.extf %0 : vector<32x128xbf16> to vector<32x128xf32>
    %c0_1 = arith.constant 0 : index
    %c0_2 = arith.constant 0 : index
    %2 = vector.load %arg2[%c0_1, %c0_2] : memref<8x32xf32, #tpu.memory_space<vmem>>, vector<8x32xf32>
    %cst = arith.constant dense<0.000000e+00> : vector<8x128xf32>
    %3 = tpu.matmul %2, %1, %cst {dimension_numbers = #tpu.dot_dimension_numbers<[1], [0], [0], [1], [0, 0, 1, 1], [], []>} : vector<8x32xf32>, vector<32x128xf32>, vector<8x128xf32> -> vector<8x128xf32>
    %cst_3 = arith.constant dense<0xFF800000> : vector<128xf32>
    %4 = vector.multi_reduction <maximumf>, %3, %cst_3 [0] : vector<8x128xf32> to vector<128xf32>
    %5 = vector.shape_cast %4 : vector<128xf32> to vector<1x128xf32>
    %6 = vector.broadcast %5 : vector<1x128xf32> to vector<8x128xf32>
    %7 = arith.subf %3, %6 : vector<8x128xf32>
    %8 = math.exp %7 : vector<8x128xf32>
    %cst_4 = arith.constant dense<0.000000e+00> : vector<128xf32>
    %9 = vector.multi_reduction <add>, %8, %cst_4 [0] : vector<8x128xf32> to vector<128xf32>
    %10 = vector.shape_cast %9 : vector<128xf32> to vector<1x128xf32>
    %11 = vector.broadcast %10 : vector<1x128xf32> to vector<8x128xf32>
    %12 = arith.divf %8, %11 : vector<8x128xf32>
    %c0_5 = arith.constant 0 : index
    %c0_6 = arith.constant 0 : index
    %13 = vector.load %arg3[%c0_5, %c0_6] : memref<8x128xf32, #tpu.memory_space<vmem>>, vector<8x128xf32>
    tpu.vector_store %arg3[%c0_5, %c0_6], %12 {strides = array<i32>} : memref<8x128xf32, #tpu.memory_space<vmem>>, vector<8x128xf32>,
    return
  }
  func.func @transform_0(%arg0: i32) -> (i32, i32) {
    %c0_i32 = arith.constant 0 : i32
    %c0_i32_0 = arith.constant 0 : i32
    return %c0_i32, %arg0 : i32, i32
  }
  func.func @transform_1(%arg0: i32) -> (i32, i32) {
    %c0_i32 = arith.constant 0 : i32
    %c0_i32_0 = arith.constant 0 : i32
    %c0_i32_1 = arith.constant 0 : i32
    return %c0_i32, %c0_i32_0 : i32, i32
  }
  func.func @transform_2(%arg0: i32) -> (i32, i32) {
    %c0_i32 = arith.constant 0 : i32
    %c0_i32_0 = arith.constant 0 : i32
    return %c0_i32, %arg0 : i32, i32
  }
}

</mosaic_0001>

<llo_original>
// kernel: hgnn_weight_forward.5
$region0: #{hgnn_weight_forward.5}
  #allocation0 [shape = 'u32[]', space=smem, size = 0x4, offset = 0x4, fixed_abs, tag = 'smem constant byte address 0x4 - core index']
  #allocation1 [shape = 'u32[72,128]{1,0:T(1,128)}', space=vmem, size = 0x9000, scoped, tag = 'internal scratch']
  %s0 = inlined_call_operand.vmem [shape: bf16[32,256], index: 0, kind: input, shape index: {}]
  %s1 = inlined_call_operand.vmem [shape: f32[8,32], index: 1, kind: input, shape index: {}]
  %s2 = inlined_call_operand.vmem [shape: f32[8,256], index: 2, kind: output, shape index: {}]
  %s3 = sld [smem:[#allocation0]]
  $region82: #{hgnn_weight_forward.5} parent=0
    _
  %s5 = ssub.s32 1, %s3
  %s6 = scalar_select 0, %s5, %s3
  $region1: #{hgnn_weight_forward.5} parent=0
    #allocation2 [shape = 'u8[16384]{0}', space=vmem, size = 0x4000, scoped, tag = 'input window, operand 0']
    loop: start=0, step=1, limit=4
    $region2: #{hgnn_weight_forward.5} parent=1 // loop_pre_header
      _
    $region3: #{hgnn_weight_forward.5} parent=1 // loop_header
      %s8 = sphi 0, %s12
      %p9 = scmp.ge.s32.totalorder %s8, 4
      %s18 = sphi 0, %s20
      %s21 = sphi 0, %s18
      %s22 = sphi 0, %s21
      %s38 = sphi 0, %s22
      %s42 = sphi 0, %s42
      %s44 = sphi 0, %s42
      %s45 = sphi 0, %s44
      %s59 = sphi 0, %s45
      %s65 = sphi 0, %s67
      %s68 = sphi 0, %s65
      %s69 = sphi 0, %s68
      %s85 = sphi 0, %s69
    $region4: #{hgnn_weight_forward.5} parent=1 // loop_header_branch
      %11 = sbr.rel (%p9) target = $region8
    $region5: #{hgnn_weight_forward.5} parent=1 // loop_body
      %s13 = ssub.s32 %s8, 1
      %s14 = ssub.s32 %s8, 2
      %s15 = sadd.s32 %s8, 1
      %s16 = ssub.s32 %s8, %s15
      %p17 = scmp.eq.s32.totalorder %s16, 0
      %s19 = sadd.s32 %s18, 1
      %s20 = scalar_select %p17, %s18, %s19
      %p23 = pneg %p17
      %p24 = scmp.eq.s32.totalorder %s8, 1
      %p25 = por %p23, %p24
      %p26 = scmp.ne.s32.totalorder %s18, %s21
      %p27 = scmp.eq.s32.totalorder %s8, 0
      %p28 = por %p26, %p27
      %p29 = scmp.ne.s32.totalorder %s18, %s21
      %p30 = scmp.eq.s32.totalorder %s13, 1
      %p31 = por %p29, %p30
      %p32 = scmp.ne.s32.totalorder %s21, %s22
      %p33 = scmp.eq.s32.totalorder %s13, 0
      %p34 = por %p32, %p33
      %p35 = scmp.ne.s32.totalorder %s21, %s22
      %p36 = scmp.eq.s32.totalorder %s14, 1
      %p37 = por %p35, %p36
      %p39 = scmp.ne.s32.totalorder %s22, %s38
      %p40 = scmp.eq.s32.totalorder %s14, 0
      %p41 = por %p39, %p40
      %s43 = sadd.s32 %s42, 1
      %p46 = scmp.eq.s32.totalorder %s8, 1
      %p47 = scmp.ne.s32.totalorder %s42, %s44
      %p48 = scmp.eq.s32.totalorder %s8, 0
      %p49 = por %p47, %p48
      %p50 = scmp.ne.s32.totalorder %s42, %s44
      %p51 = scmp.eq.s32.totalorder %s13, 1
      %p52 = por %p50, %p51
      %p53 = scmp.ne.s32.totalorder %s44, %s45
      %p54 = scmp.eq.s32.totalorder %s13, 0
      %p55 = por %p53, %p54
      %p56 = scmp.ne.s32.totalorder %s44, %s45
      %p57 = scmp.eq.s32.totalorder %s14, 1
      %p58 = por %p56, %p57
      %p60 = scmp.ne.s32.totalorder %s45, %s59
      %p61 = scmp.eq.s32.totalorder %s14, 0
      %p62 = por %p60, %p61
      %s63 = ssub.s32 %s8, %s15
      %p64 = scmp.eq.s32.totalorder %s63, 0
      %s66 = sadd.s32 %s65, 1
      %s67 = scalar_select %p64, %s65, %s66
      %p70 = pneg %p64
      %p71 = scmp.eq.s32.totalorder %s8, 1
      %p72 = por %p70, %p71
      %p73 = scmp.ne.s32.totalorder %s65, %s68
      %p74 = scmp.eq.s32.totalorder %s8, 0
      %p75 = por %p73, %p74
      %p76 = scmp.ne.s32.totalorder %s65, %s68
      %p77 = scmp.eq.s32.totalorder %s13, 1
      %p78 = por %p76, %p77
      %p79 = scmp.ne.s32.totalorder %s68, %s69
      %p80 = scmp.eq.s32.totalorder %s13, 0
      %p81 = por %p79, %p80
      %p82 = scmp.ne.s32.totalorder %s68, %s69
      %p83 = scmp.eq.s32.totalorder %s14, 1
      %p84 = por %p82, %p83
      %p86 = scmp.ne.s32.totalorder %s69, %s85
      %p87 = scmp.eq.s32.totalorder %s14, 0
      %p88 = por %p86, %p87
      %p89 = scmp.le.s32.totalorder 1, %s8
      %p90 = scmp.lt.s32.totalorder %s8, 3
      %p91 = pnand %p89, %p90
      %p92 = pneg %p91
      // Predicated region
      $region9: #{hgnn_weight_forward.5} parent=5 // pred_check
        _
      $region10: #{hgnn_weight_forward.5} parent=5 // pred_check_branch
        %94 = sbr.rel (%p91) target = $region12
      $region11: #{hgnn_weight_forward.5} parent=5 // pred_region
        %s95 = ssub.s32 %s8, 1
        // Predicated region
        $region13: #{hgnn_weight_forward.5} parent=11 // pred_check
          %p96 = pneg %p55
        $region14: #{hgnn_weight_forward.5} parent=11 // pred_check_branch
          %98 = sbr.rel (%p96) target = $region16
        $region15: #{hgnn_weight_forward.5} parent=11 // pred_region
          _
        $region16: #{hgnn_weight_forward.5} parent=11 // pred_fallthru
          _
      $region12: #{hgnn_weight_forward.5} parent=5 // pred_fallthru
        _
      %p99 = scmp.lt.s32.totalorder %s8, 2
      // Predicated region
      $region17: #{hgnn_weight_forward.5} parent=5 // pred_check
        %p100 = pneg %p99
      $region18: #{hgnn_weight_forward.5} parent=5 // pred_check_branch
        %102 = sbr.rel (%p100) target = $region20
      $region19: #{hgnn_weight_forward.5} parent=5 // pred_region
        // Predicated region
        $region21: #{hgnn_weight_forward.5} parent=19 // pred_check
          %p103 = pneg %p28
        $region22: #{hgnn_weight_forward.5} parent=19 // pred_check_branch
          %105 = sbr.rel (%p103) target = $region24
        $region23: #{hgnn_weight_forward.5} parent=19 // pred_region
          %s106 = sand.u32 %s18, 1
          %s107 = sand.u32 %s18, 1
          %s108 = smul.addr %s107, 16
          %s109 = scalar_lea.vmem [#allocation2], %s108
          %s110 = smul.addr %s8, 4
          %s111 = scalar_lea.vmem %s0, %s110
          // Predicated region
          $region25: #{hgnn_weight_forward.5} parent=23 // pred_check
            _
          $region26: #{hgnn_weight_forward.5} parent=23 // pred_check_branch
            %113 = sbr.rel (0) target = $region28
          $region27: #{hgnn_weight_forward.5} parent=23 // pred_region
            // Predicated region
            $region29: #{hgnn_weight_forward.5} parent=27 // pred_check
              _
            $region30: #{hgnn_weight_forward.5} parent=27 // pred_check_branch
              %115 = sbr.rel target = $region32
            $region31: #{hgnn_weight_forward.5} parent=27 // pred_region
              // Predicated region
              $region44: #{hgnn_weight_forward.5} parent=31 // pred_check
                _
              $region45: #{hgnn_weight_forward.5} parent=31 // pred_check_branch
                %137 = sbr.rel (0) target = $region47
              $region46: #{hgnn_weight_forward.5} parent=31 // pred_region
                loop: start=0, step=1, limit=1
                $region48: #{hgnn_weight_forward.5} parent=46 // loop_pre_header
                  _
                $region49: #{hgnn_weight_forward.5} parent=46 // loop_header
                  %s139 = sphi 0, %s143
                  %p140 = scmp.ge.s32.totalorder %s139, 1
                  %s144 = sphi %s111, %s111
                  %s145 = sphi %s109, %s109
                $region50: #{hgnn_weight_forward.5} parent=46 // loop_header_branch
                  %142 = sbr.rel (%p140) target = $region54
                $region51: #{hgnn_weight_forward.5} parent=46 // loop_body
                  _
                $region52: #{hgnn_weight_forward.5} parent=46 // loop_footer
                  %s143 = sadd.s32 1, %s139
                $region53: #{hgnn_weight_forward.5} parent=46 // loop_footer_branch
                  %138 = sbr.rel target = $region49
                $region54: #{hgnn_weight_forward.5} parent=46 // loop_exit
                  _
                %s147 = ssub.s32 16, 1
                loop: start=0, step=1, limit=1
                $region55: #{hgnn_weight_forward.5} parent=46 // loop_pre_header
                  _
                $region56: #{hgnn_weight_forward.5} parent=46 // loop_header
                  %s149 = sphi 0, %s153
                  %p150 = scmp.ge.s32.totalorder %s149, 1
                  %s154 = sphi %s111, %s111
                  %s155 = sphi %s109, %s109
                $region57: #{hgnn_weight_forward.5} parent=46 // loop_header_branch
                  %152 = sbr.rel (%p150) target = $region61
                $region58: #{hgnn_weight_forward.5} parent=46 // loop_body
                  %v156 = vld [vmem:[%s154] sm:%s147]
                  %157 = vst [vmem:[%s155] sm:%s147] %v156
                  %v158 = vld [vmem:[%s154 + $0x8] sm:%s147]
                  %159 = vst [vmem:[%s155 + $0x4] sm:%s147] %v158
                  %v160 = vld [vmem:[%s154 + $0x10] sm:%s147]
                  %161 = vst [vmem:[%s155 + $0x8] sm:%s147] %v160
                  %v162 = vld [vmem:[%s154 + $0x18] sm:%s147]
                  %163 = vst [vmem:[%s155 + $0xc] sm:%s147] %v162
                $region59: #{hgnn_weight_forward.5} parent=46 // loop_footer
                  %s153 = sadd.s32 1, %s149
                $region60: #{hgnn_weight_forward.5} parent=46 // loop_footer_branch
                  %148 = sbr.rel target = $region56
                $region61: #{hgnn_weight_forward.5} parent=46 // loop_exit
                  _
              $region47: #{hgnn_weight_forward.5} parent=31 // pred_fallthru
                _
            $region32: #{hgnn_weight_forward.5} parent=27 // pred_fallthru
              _
            // Predicated region
            $region33: #{hgnn_weight_forward.5} parent=27 // pred_check
              _
            $region34: #{hgnn_weight_forward.5} parent=27 // pred_check_branch
              %117 = sbr.rel (0) target = $region36
            $region35: #{hgnn_weight_forward.5} parent=27 // pred_region
              %s119 = ssub.s32 16, 1
              loop: start=0, step=1, limit=1
              $region37: #{hgnn_weight_forward.5} parent=35 // loop_pre_header
                _
              $region38: #{hgnn_weight_forward.5} parent=35 // loop_header
                %s121 = sphi 0, %s125
                %p122 = scmp.ge.s32.totalorder %s121, 1
                %s126 = sphi %s111, %s111
                %s127 = sphi %s109, %s109
              $region39: #{hgnn_weight_forward.5} parent=35 // loop_header_branch
                %124 = sbr.rel (%p122) target = $region43
              $region40: #{hgnn_weight_forward.5} parent=35 // loop_body
                %v128 = vld [vmem:[%s126] sm:%s119]
                %129 = vst [vmem:[%s127] sm:%s119] %v128
                %v130 = vld [vmem:[%s126 + $0x8] sm:%s119]
                %131 = vst [vmem:[%s127 + $0x4] sm:%s119] %v130
                %v132 = vld [vmem:[%s126 + $0x10] sm:%s119]
                %133 = vst [vmem:[%s127 + $0x8] sm:%s119] %v132
                %v134 = vld [vmem:[%s126 + $0x18] sm:%s119]
                %135 = vst [vmem:[%s127 + $0xc] sm:%s119] %v134
              $region41: #{hgnn_weight_forward.5} parent=35 // loop_footer
                %s125 = sadd.s32 1, %s121
              $region42: #{hgnn_weight_forward.5} parent=35 // loop_footer_branch
                %120 = sbr.rel target = $region38
              $region43: #{hgnn_weight_forward.5} parent=35 // loop_exit
                _
            $region36: #{hgnn_weight_forward.5} parent=27 // pred_fallthru
              _
          $region28: #{hgnn_weight_forward.5} parent=23 // pred_fallthru
            _
          %164 = vnop
        $region24: #{hgnn_weight_forward.5} parent=19 // pred_fallthru
          _
      $region20: #{hgnn_weight_forward.5} parent=5 // pred_fallthru
        _
      %p165 = scmp.le.s32.totalorder 1, %s8
      %p166 = scmp.lt.s32.totalorder %s8, 3
      %p167 = pnand %p165, %p166
      %p168 = pneg %p167
      // Predicated region
      $region62: #{hgnn_weight_forward.5} parent=5 // pred_check
        _
      $region63: #{hgnn_weight_forward.5} parent=5 // pred_check_branch
        %170 = sbr.rel (%p167) target = $region65
      $region64: #{hgnn_weight_forward.5} parent=5 // pred_region
        %s171 = ssub.s32 %s8, 1
        %s172 = sand.u32 %s21, 1
        %s173 = sand.u32 %s21, 1
        %s174 = smul.addr %s173, 16
        %s175 = scalar_lea.vmem [#allocation2], %s174
        // Predicated region
        $region66: #{hgnn_weight_forward.5} parent=64 // pred_check
          %p176 = pneg %p34
        $region67: #{hgnn_weight_forward.5} parent=64 // pred_check_branch
          %178 = sbr.rel (%p176) target = $region69
        $region68: #{hgnn_weight_forward.5} parent=64 // pred_region
          _
        $region69: #{hgnn_weight_forward.5} parent=64 // pred_fallthru
          _
        %s179 = sand.u32 %s21, 1
        %s180 = sand.u32 %s21, 1
        %s181 = smul.addr %s180, 16
        %s182 = scalar_lea.vmem [#allocation2], %s181
        %p183 = pneg %p34
        %p184 = pneg %p31
        %p185 = pneg %p55
        %p186 = pneg %p52
        %p187 = pneg %p81
        %p188 = pneg %p78
        %p189 = scmp.lt.s32.totalorder %s13, 1
        %s190 = scalar_select %p189, %s13, 1
        %s191 = smul.addr %s190, 8
        %s192 = scalar_lea.vmem %s2, %s191
        %p193 = scmp.lt.s32.totalorder %s13, 1
        %s194 = scalar_select %p193, %s13, 1
        %s195 = smul.addr %s194, 8
        %s196 = scalar_lea.vmem %s2, %s195
        %v197 = vld [vmem:[%s175] sm:$0xf]
        %v198 = vld [vmem:[%s175 + $0x4] sm:$0xf]
        %v199 = vld [vmem:[%s175 + $0x8] sm:$0xf]
        %v200 = vld [vmem:[%s175 + $0xc] sm:$0xf]
        %v201 = vunpack.c.l.bf16 %v197
        %v202 = vunpack.c.l.bf16 %v198
        %v203 = vunpack.c.l.bf16 %v199
        %v204 = vunpack.c.l.bf16 %v200
        %v205 = vld [vmem:[%s1] sm:$0xff]
        %vm206 = vcmask 261120
        %v208 = vsel %vm206, %v205, 0
        %210 = vmatpush.msra.mxu0 0.0
        %211 = vmatpush.msra.mxu0 0.0
        %212 = vmatpush.msra.mxu0 0.0
        %213 = vmatpush.msra.mxu0 0.0
        %214 = vmatpush.msra.mxu0 0.0
        %215 = vmatpush.msra.mxu0 0.0
        %216 = vmatpush.msra.mxu0 0.0
        %217 = vmatpush.msra.mxu0 0.0
        %218 = vmatpush.msra.mxu0 0.0
        %219 = vmatpush.msra.mxu0 0.0
        %220 = vmatpush.msra.mxu0 0.0
        %221 = vmatpush.msra.mxu0 0.0
        %222 = vmatpush.msra.mxu0 %v204
        %223 = vmatpush.msra.mxu0 %v203
        %224 = vmatpush.msra.mxu0 %v202
        %225 = vmatpush.msra.mxu0 %v201
        %226 = vmatmul.f32.gmra.mxu0 %v208
        %v227 = vpop.f32.mrf.mxu0
        %v228 = vadd.f32 0.0, %v227
        %229 = vdwg.mxu0
        %v230 = vrot.slane %v228, 4
        %v231 = vmax.f32 %v228, %v230
        %v232 = vrot.slane %v231, 2
        %v233 = vmax.f32 %v231, %v232
        %v234 = vrot.slane %v233, 1
        %v235 = vmax.f32 %v233, %v234
        %v236 = vsub.f32 %v228, %v235
        %v237 = vmul.f32 %v236, 1.442695
        %v238 = vpow.pop %v237
        %v239 = vrot.slane %v238, 4
        %v240 = vadd.f32 %v238, %v239
        %v241 = vrot.slane %v240, 2
        %v242 = vadd.f32 %v240, %v241
        %v243 = vrot.slane %v242, 1
        %v244 = vadd.f32 %v242, %v243
        %v245 = vrcp.pop %v244
        %v246 = vmul.f32 %v244, %v245
        %v247 = vsub.f32 1.0, %v246
        %v248 = vmul.f32 %v245, %v247
        %v249 = vadd.f32 %v245, %v248
        %vm250 = vweird.f32 %v244
        %vm251 = vweird.f32 %v245
        %vm252 = vmor %vm250, %vm251
        %v253 = vsel %vm252, %v245, %v249
        %v254 = vand.u32 2147483647, %v244
        %vm255 = vcmp.eq.f32.partialorder %v254, 8.507059e+37
        %v256 = vand.u32 %v244, 2147483648
        %v257 = vor.u32 1.1754944e-38, %v256
        %v258 = vsel %vm255, %v257, %v253
        %v259 = vmul.f32 %v238, %v258
        %260 = vst [vmem:[%s196] sm:$0xff] %v259
        %p261 = scmp.lt.s32.totalorder %s13, 1
        %s262 = scalar_select %p261, %s13, 1
        %s263 = smul.addr %s262, 8
        %s264 = scalar_lea.vmem %s2, %s263
        // Predicated region
        $region70: #{hgnn_weight_forward.5} parent=64 // pred_check
          %p265 = pneg %p78
        $region71: #{hgnn_weight_forward.5} parent=64 // pred_check_branch
          %267 = sbr.rel (%p265) target = $region73
        $region72: #{hgnn_weight_forward.5} parent=64 // pred_region
          _
        $region73: #{hgnn_weight_forward.5} parent=64 // pred_fallthru
          _
      $region65: #{hgnn_weight_forward.5} parent=5 // pred_fallthru
        _
      %p268 = scmp.le.s32.totalorder 2, %s8
      // Predicated region
      $region74: #{hgnn_weight_forward.5} parent=5 // pred_check
        %p269 = pneg %p268
      $region75: #{hgnn_weight_forward.5} parent=5 // pred_check_branch
        %271 = sbr.rel (%p269) target = $region77
      $region76: #{hgnn_weight_forward.5} parent=5 // pred_region
        %s272 = ssub.s32 %s8, 2
        // Predicated region
        $region78: #{hgnn_weight_forward.5} parent=76 // pred_check
          %p273 = pneg %p84
        $region79: #{hgnn_weight_forward.5} parent=76 // pred_check_branch
          %275 = sbr.rel (%p273) target = $region81
        $region80: #{hgnn_weight_forward.5} parent=76 // pred_region
          %p276 = scmp.lt.s32.totalorder %s14, 1
          %s277 = scalar_select %p276, %s14, 1
          %s278 = smul.addr %s277, 8
          %s279 = scalar_lea.vmem %s2, %s278
        $region81: #{hgnn_weight_forward.5} parent=76 // pred_fallthru
          _
      $region77: #{hgnn_weight_forward.5} parent=5 // pred_fallthru
        _
    $region6: #{hgnn_weight_forward.5} parent=1 // loop_footer
      %s12 = sadd.s32 1, %s8
    $region7: #{hgnn_weight_forward.5} parent=1 // loop_footer_branch
      %7 = sbr.rel target = $region3
    $region8: #{hgnn_weight_forward.5} parent=1 // loop_exit
      _

// kernel: hgnn_weight_forward.3
$region0: #{hgnn_weight_forward.3}
  #allocation0 [shape = 'u32[]', space=smem, size = 0x4, offset = 0x4, fixed_abs, tag = 'smem constant byte address 0x4 - core index']
  #allocation1 [shape = 'u32[72,128]{1,0:T(1,128)}', space=vmem, size = 0x9000, scoped, tag = 'internal scratch']
  %s0 = inlined_call_operand.vmem [shape: f32[256,16], index: 0, kind: input, shape index: {}]
  %s1 = inlined_call_operand.vmem [shape: bf16[32,256], index: 1, kind: input, shape index: {}]
  %s2 = inlined_call_operand.vmem [shape: f32[2,32,16], index: 2, kind: output, shape index: {0}]
  %s3 = inlined_call_operand.vmem [shape: f32[2,32,1], index: 3, kind: output, shape index: {1}]
  %s4 = inlined_call_operand.vmem [shape: f32[2,1,16], index: 4, kind: output, shape index: {2}]
  %s5 = inlined_call_operand.vmem [shape: f32[2,1,16], index: 5, kind: output, shape index: {3}]
  %6 = xla_tuple %s2, %s3, %s4, %s5
  %s7 = sld [smem:[#allocation0]]
  $region110: #{hgnn_weight_forward.3} parent=0
    _
  %s9 = ssub.s32 1, %s7
  %s10 = scalar_select 0, %s9, %s7
  $region1: #{hgnn_weight_forward.3} parent=0
    #allocation2 [shape = 'u8[16384]{0}', space=vmem, size = 0x4000, scoped, tag = 'input window, operand 1']
    loop: start=0, step=1, limit=4
    $region2: #{hgnn_weight_forward.3} parent=1 // loop_pre_header
      _
    $region3: #{hgnn_weight_forward.3} parent=1 // loop_header
      %s12 = sphi 0, %s16
      %p13 = scmp.ge.s32.totalorder %s12, 4
      %s19 = sphi 0, %s31
      %s20 = sphi 0, %s27
      %s21 = sphi 0, %s19
      %s22 = sphi 0, %s20
      %s23 = sphi 0, %s21
      %s24 = sphi 0, %s22
      %s36 = sphi 0, %s38
      %s39 = sphi 0, %s36
      %s40 = sphi 0, %s39
      %s56 = sphi 0, %s40
      %s64 = sphi 0, %s66
      %s67 = sphi 0, %s64
      %s68 = sphi 0, %s67
      %s84 = sphi 0, %s68
      %s90 = sphi 0, %s92
      %s93 = sphi 0, %s90
      %s94 = sphi 0, %s93
      %s110 = sphi 0, %s94
      %s116 = sphi 0, %s118
      %s119 = sphi 0, %s116
      %s120 = sphi 0, %s119
      %s136 = sphi 0, %s120
      %s142 = sphi 0, %s144
      %s145 = sphi 0, %s142
      %s146 = sphi 0, %s145
      %s162 = sphi 0, %s146
      %s168 = sphi 0, %s170
      %s171 = sphi 0, %s168
      %s172 = sphi 0, %s171
      %s188 = sphi 0, %s172
    $region4: #{hgnn_weight_forward.3} parent=1 // loop_header_branch
      %15 = sbr.rel (%p13) target = $region8
    $region5: #{hgnn_weight_forward.3} parent=1 // loop_body
      %s17 = ssub.s32 %s12, 1
      %s18 = ssub.s32 %s12, 2
      %s25 = sadd.s32 1, %s20
      %p26 = scmp.ge.s32.totalorder %s25, 1
      %s27 = scalar_select %p26, 0, %s25
      %s28 = sadd.s32 1, %s19
      %s29 = scalar_select %p26, %s28, %s19
      %p30 = scmp.ge.s32.totalorder %s29, 2
      %s31 = scalar_select %p30, 0, %s29
      %s32 = sadd.s32 %s19, %s20
      %s33 = sadd.s32 %s31, %s27
      %s34 = ssub.s32 %s32, %s33
      %p35 = scmp.eq.s32.totalorder %s34, 0
      %s37 = sadd.s32 %s36, 1
      %s38 = scalar_select %p35, %s36, %s37
      %p41 = pneg %p35
      %p42 = scmp.eq.s32.totalorder %s12, 1
      %p43 = por %p41, %p42
      %p44 = scmp.ne.s32.totalorder %s36, %s39
      %p45 = scmp.eq.s32.totalorder %s12, 0
      %p46 = por %p44, %p45
      %p47 = scmp.ne.s32.totalorder %s36, %s39
      %p48 = scmp.eq.s32.totalorder %s17, 1
      %p49 = por %p47, %p48
      %p50 = scmp.ne.s32.totalorder %s39, %s40
      %p51 = scmp.eq.s32.totalorder %s17, 0
      %p52 = por %p50, %p51
      %p53 = scmp.ne.s32.totalorder %s39, %s40
      %p54 = scmp.eq.s32.totalorder %s18, 1
      %p55 = por %p53, %p54
      %p57 = scmp.ne.s32.totalorder %s40, %s56
      %p58 = scmp.eq.s32.totalorder %s18, 0
      %p59 = por %p57, %p58
      %s60 = sadd.s32 %s19, %s20
      %s61 = sadd.s32 %s31, %s27
      %s62 = ssub.s32 %s60, %s61
      %p63 = scmp.eq.s32.totalorder %s62, 0
      %s65 = sadd.s32 %s64, 1
      %s66 = scalar_select %p63, %s64, %s65
      %p69 = pneg %p63
      %p70 = scmp.eq.s32.totalorder %s12, 1
      %p71 = por %p69, %p70
      %p72 = scmp.ne.s32.totalorder %s64, %s67
      %p73 = scmp.eq.s32.totalorder %s12, 0
      %p74 = por %p72, %p73
      %p75 = scmp.ne.s32.totalorder %s64, %s67
      %p76 = scmp.eq.s32.totalorder %s17, 1
      %p77 = por %p75, %p76
      %p78 = scmp.ne.s32.totalorder %s67, %s68
      %p79 = scmp.eq.s32.totalorder %s17, 0
      %p80 = por %p78, %p79
      %p81 = scmp.ne.s32.totalorder %s67, %s68
      %p82 = scmp.eq.s32.totalorder %s18, 1
      %p83 = por %p81, %p82
      %p85 = scmp.ne.s32.totalorder %s68, %s84
      %p86 = scmp.eq.s32.totalorder %s18, 0
      %p87 = por %p85, %p86
      %s88 = ssub.s32 %s19, %s31
      %p89 = scmp.eq.s32.totalorder %s88, 0
      %s91 = sadd.s32 %s90, 1
      %s92 = scalar_select %p89, %s90, %s91
      %p95 = pneg %p89
      %p96 = scmp.eq.s32.totalorder %s12, 1
      %p97 = por %p95, %p96
      %p98 = scmp.ne.s32.totalorder %s90, %s93
      %p99 = scmp.eq.s32.totalorder %s12, 0
      %p100 = por %p98, %p99
      %p101 = scmp.ne.s32.totalorder %s90, %s93
      %p102 = scmp.eq.s32.totalorder %s17, 1
      %p103 = por %p101, %p102
      %p104 = scmp.ne.s32.totalorder %s93, %s94
      %p105 = scmp.eq.s32.totalorder %s17, 0
      %p106 = por %p104, %p105
      %p107 = scmp.ne.s32.totalorder %s93, %s94
      %p108 = scmp.eq.s32.totalorder %s18, 1
      %p109 = por %p107, %p108
      %p111 = scmp.ne.s32.totalorder %s94, %s110
      %p112 = scmp.eq.s32.totalorder %s18, 0
      %p113 = por %p111, %p112
      %s114 = ssub.s32 %s19, %s31
      %p115 = scmp.eq.s32.totalorder %s114, 0
      %s117 = sadd.s32 %s116, 1
      %s118 = scalar_select %p115, %s116, %s117
      %p121 = pneg %p115
      %p122 = scmp.eq.s32.totalorder %s12, 1
      %p123 = por %p121, %p122
      %p124 = scmp.ne.s32.totalorder %s116, %s119
      %p125 = scmp.eq.s32.totalorder %s12, 0
      %p126 = por %p124, %p125
      %p127 = scmp.ne.s32.totalorder %s116, %s119
      %p128 = scmp.eq.s32.totalorder %s17, 1
      %p129 = por %p127, %p128
      %p130 = scmp.ne.s32.totalorder %s119, %s120
      %p131 = scmp.eq.s32.totalorder %s17, 0
      %p132 = por %p130, %p131
      %p133 = scmp.ne.s32.totalorder %s119, %s120
      %p134 = scmp.eq.s32.totalorder %s18, 1
      %p135 = por %p133, %p134
      %p137 = scmp.ne.s32.totalorder %s120, %s136
      %p138 = scmp.eq.s32.totalorder %s18, 0
      %p139 = por %p137, %p138
      %s140 = ssub.s32 %s19, %s31
      %p141 = scmp.eq.s32.totalorder %s140, 0
      %s143 = sadd.s32 %s142, 1
      %s144 = scalar_select %p141, %s142, %s143
      %p147 = pneg %p141
      %p148 = scmp.eq.s32.totalorder %s12, 1
      %p149 = por %p147, %p148
      %p150 = scmp.ne.s32.totalorder %s142, %s145
      %p151 = scmp.eq.s32.totalorder %s12, 0
      %p152 = por %p150, %p151
      %p153 = scmp.ne.s32.totalorder %s142, %s145
      %p154 = scmp.eq.s32.totalorder %s17, 1
      %p155 = por %p153, %p154
      %p156 = scmp.ne.s32.totalorder %s145, %s146
      %p157 = scmp.eq.s32.totalorder %s17, 0
      %p158 = por %p156, %p157
      %p159 = scmp.ne.s32.totalorder %s145, %s146
      %p160 = scmp.eq.s32.totalorder %s18, 1
      %p161 = por %p159, %p160
      %p163 = scmp.ne.s32.totalorder %s146, %s162
      %p164 = scmp.eq.s32.totalorder %s18, 0
      %p165 = por %p163, %p164
      %s166 = ssub.s32 %s19, %s31
      %p167 = scmp.eq.s32.totalorder %s166, 0
      %s169 = sadd.s32 %s168, 1
      %s170 = scalar_select %p167, %s168, %s169
      %p173 = pneg %p167
      %p174 = scmp.eq.s32.totalorder %s12, 1
      %p175 = por %p173, %p174
      %p176 = scmp.ne.s32.totalorder %s168, %s171
      %p177 = scmp.eq.s32.totalorder %s12, 0
      %p178 = por %p176, %p177
      %p179 = scmp.ne.s32.totalorder %s168, %s171
      %p180 = scmp.eq.s32.totalorder %s17, 1
      %p181 = por %p179, %p180
      %p182 = scmp.ne.s32.totalorder %s171, %s172
      %p183 = scmp.eq.s32.totalorder %s17, 0
      %p184 = por %p182, %p183
      %p185 = scmp.ne.s32.totalorder %s171, %s172
      %p186 = scmp.eq.s32.totalorder %s18, 1
      %p187 = por %p185, %p186
      %p189 = scmp.ne.s32.totalorder %s172, %s188
      %p190 = scmp.eq.s32.totalorder %s18, 0
      %p191 = por %p189, %p190
      %p192 = scmp.le.s32.totalorder 1, %s12
      %p193 = scmp.lt.s32.totalorder %s12, 3
      %p194 = pnand %p192, %p193
      %p195 = pneg %p194
      // Predicated region
      $region9: #{hgnn_weight_forward.3} parent=5 // pred_check
        _
      $region10: #{hgnn_weight_forward.3} parent=5 // pred_check_branch
        %197 = sbr.rel (%p194) target = $region12
      $region11: #{hgnn_weight_forward.3} parent=5 // pred_region
        %s198 = ssub.s32 %s12, 1
      $region12: #{hgnn_weight_forward.3} parent=5 // pred_fallthru
        _
      %p199 = scmp.lt.s32.totalorder %s12, 2
      // Predicated region
      $region13: #{hgnn_weight_forward.3} parent=5 // pred_check
        %p200 = pneg %p199
      $region14: #{hgnn_weight_forward.3} parent=5 // pred_check_branch
        %202 = sbr.rel (%p200) target = $region16
      $region15: #{hgnn_weight_forward.3} parent=5 // pred_region
        // Predicated region
        $region17: #{hgnn_weight_forward.3} parent=15 // pred_check
          %p203 = pneg %p46
        $region18: #{hgnn_weight_forward.3} parent=15 // pred_check_branch
          %205 = sbr.rel (%p203) target = $region20
        $region19: #{hgnn_weight_forward.3} parent=15 // pred_region
          %s206 = sadd.s32 %s19, %s20
          %s207 = smul.u32 16, %s206
          %p208 = scmp.lt.s32.totalorder %s207, 31
          %s209 = scalar_select %p208, %s207, 31
          %s210 = smul.addr %s209, 8
          %s211 = scalar_lea.vmem %s0, %s210
          %s212 = sadd.s32 %s19, %s20
          %s213 = smul.u32 16, %s212
        $region20: #{hgnn_weight_forward.3} parent=15 // pred_fallthru
          _
        // Predicated region
        $region21: #{hgnn_weight_forward.3} parent=15 // pred_check
          %p214 = pneg %p74
        $region22: #{hgnn_weight_forward.3} parent=15 // pred_check_branch
          %216 = sbr.rel (%p214) target = $region24
        $region23: #{hgnn_weight_forward.3} parent=15 // pred_region
          %s217 = sand.u32 %s64, 1
          %s218 = sand.u32 %s64, 1
          %s219 = smul.addr %s218, 16
          %s220 = scalar_lea.vmem [#allocation2], %s219
          %s221 = sadd.s32 %s19, %s20
          %s222 = smul.addr %s221, 4
          %s223 = scalar_lea.vmem %s1, %s222
          // Predicated region
          $region25: #{hgnn_weight_forward.3} parent=23 // pred_check
            _
          $region26: #{hgnn_weight_forward.3} parent=23 // pred_check_branch
            %225 = sbr.rel (0) target = $region28
          $region27: #{hgnn_weight_forward.3} parent=23 // pred_region
            // Predicated region
            $region29: #{hgnn_weight_forward.3} parent=27 // pred_check
              _
            $region30: #{hgnn_weight_forward.3} parent=27 // pred_check_branch
              %227 = sbr.rel target = $region32
            $region31: #{hgnn_weight_forward.3} parent=27 // pred_region
              // Predicated region
              $region44: #{hgnn_weight_forward.3} parent=31 // pred_check
                _
              $region45: #{hgnn_weight_forward.3} parent=31 // pred_check_branch
                %249 = sbr.rel (0) target = $region47
              $region46: #{hgnn_weight_forward.3} parent=31 // pred_region
                loop: start=0, step=1, limit=1
                $region48: #{hgnn_weight_forward.3} parent=46 // loop_pre_header
                  _
                $region49: #{hgnn_weight_forward.3} parent=46 // loop_header
                  %s251 = sphi 0, %s255
                  %p252 = scmp.ge.s32.totalorder %s251, 1
                  %s256 = sphi %s223, %s223
                  %s257 = sphi %s220, %s220
                $region50: #{hgnn_weight_forward.3} parent=46 // loop_header_branch
                  %254 = sbr.rel (%p252) target = $region54
                $region51: #{hgnn_weight_forward.3} parent=46 // loop_body
                  _
                $region52: #{hgnn_weight_forward.3} parent=46 // loop_footer
                  %s255 = sadd.s32 1, %s251
                $region53: #{hgnn_weight_forward.3} parent=46 // loop_footer_branch
                  %250 = sbr.rel target = $region49
                $region54: #{hgnn_weight_forward.3} parent=46 // loop_exit
                  _
                %s259 = ssub.s32 16, 1
                loop: start=0, step=1, limit=1
                $region55: #{hgnn_weight_forward.3} parent=46 // loop_pre_header
                  _
                $region56: #{hgnn_weight_forward.3} parent=46 // loop_header
                  %s261 = sphi 0, %s265
                  %p262 = scmp.ge.s32.totalorder %s261, 1
                  %s266 = sphi %s223, %s223
                  %s267 = sphi %s220, %s220
                $region57: #{hgnn_weight_forward.3} parent=46 // loop_header_branch
                  %264 = sbr.rel (%p262) target = $region61
                $region58: #{hgnn_weight_forward.3} parent=46 // loop_body
                  %v268 = vld [vmem:[%s266] sm:%s259]
                  %269 = vst [vmem:[%s267] sm:%s259] %v268
                  %v270 = vld [vmem:[%s266 + $0x8] sm:%s259]
                  %271 = vst [vmem:[%s267 + $0x4] sm:%s259] %v270
                  %v272 = vld [vmem:[%s266 + $0x10] sm:%s259]
                  %273 = vst [vmem:[%s267 + $0x8] sm:%s259] %v272
                  %v274 = vld [vmem:[%s266 + $0x18] sm:%s259]
                  %275 = vst [vmem:[%s267 + $0xc] sm:%s259] %v274
                $region59: #{hgnn_weight_forward.3} parent=46 // loop_footer
                  %s265 = sadd.s32 1, %s261
                $region60: #{hgnn_weight_forward.3} parent=46 // loop_footer_branch
                  %260 = sbr.rel target = $region56
                $region61: #{hgnn_weight_forward.3} parent=46 // loop_exit
                  _
              $region47: #{hgnn_weight_forward.3} parent=31 // pred_fallthru
                _
            $region32: #{hgnn_weight_forward.3} parent=27 // pred_fallthru
              _
            // Predicated region
            $region33: #{hgnn_weight_forward.3} parent=27 // pred_check
              _
            $region34: #{hgnn_weight_forward.3} parent=27 // pred_check_branch
              %229 = sbr.rel (0) target = $region36
            $region35: #{hgnn_weight_forward.3} parent=27 // pred_region
              %s231 = ssub.s32 16, 1
              loop: start=0, step=1, limit=1
              $region37: #{hgnn_weight_forward.3} parent=35 // loop_pre_header
                _
              $region38: #{hgnn_weight_forward.3} parent=35 // loop_header
                %s233 = sphi 0, %s237
                %p234 = scmp.ge.s32.totalorder %s233, 1
                %s238 = sphi %s223, %s223
                %s239 = sphi %s220, %s220
              $region39: #{hgnn_weight_forward.3} parent=35 // loop_header_branch
                %236 = sbr.rel (%p234) target = $region43
              $region40: #{hgnn_weight_forward.3} parent=35 // loop_body
                %v240 = vld [vmem:[%s238] sm:%s231]
                %241 = vst [vmem:[%s239] sm:%s231] %v240
                %v242 = vld [vmem:[%s238 + $0x8] sm:%s231]
                %243 = vst [vmem:[%s239 + $0x4] sm:%s231] %v242
                %v244 = vld [vmem:[%s238 + $0x10] sm:%s231]
                %245 = vst [vmem:[%s239 + $0x8] sm:%s231] %v244
                %v246 = vld [vmem:[%s238 + $0x18] sm:%s231]
                %247 = vst [vmem:[%s239 + $0xc] sm:%s231] %v246
              $region41: #{hgnn_weight_forward.3} parent=35 // loop_footer
                %s237 = sadd.s32 1, %s233
              $region42: #{hgnn_weight_forward.3} parent=35 // loop_footer_branch
                %232 = sbr.rel target = $region38
              $region43: #{hgnn_weight_forward.3} parent=35 // loop_exit
                _
            $region36: #{hgnn_weight_forward.3} parent=27 // pred_fallthru
              _
          $region28: #{hgnn_weight_forward.3} parent=23 // pred_fallthru
            _
          %276 = vnop
        $region24: #{hgnn_weight_forward.3} parent=15 // pred_fallthru
          _
      $region16: #{hgnn_weight_forward.3} parent=5 // pred_fallthru
        _
      %p277 = scmp.le.s32.totalorder 1, %s12
      %p278 = scmp.lt.s32.totalorder %s12, 3
      %p279 = pnand %p277, %p278
      %p280 = pneg %p279
      // Predicated region
      $region62: #{hgnn_weight_forward.3} parent=5 // pred_check
        _
      $region63: #{hgnn_weight_forward.3} parent=5 // pred_check_branch
        %282 = sbr.rel (%p279) target = $region65
      $region64: #{hgnn_weight_forward.3} parent=5 // pred_region
        %s283 = ssub.s32 %s12, 1
        %s284 = sand.u32 %s67, 1
        %s285 = sand.u32 %s67, 1
        %s286 = smul.addr %s285, 16
        %s287 = scalar_lea.vmem [#allocation2], %s286
        // Predicated region
        $region66: #{hgnn_weight_forward.3} parent=64 // pred_check
          %p288 = pneg %p80
        $region67: #{hgnn_weight_forward.3} parent=64 // pred_check_branch
          %290 = sbr.rel (%p288) target = $region69
        $region68: #{hgnn_weight_forward.3} parent=64 // pred_region
          _
        $region69: #{hgnn_weight_forward.3} parent=64 // pred_fallthru
          _
        %s291 = sadd.s32 %s21, %s22
        %s292 = smul.u32 16, %s291
        %p293 = scmp.lt.s32.totalorder %s292, 31
        %s294 = scalar_select %p293, %s292, 31
        %s295 = smul.addr %s294, 8
        %s296 = scalar_lea.vmem %s0, %s295
        %p297 = pneg %p52
        %p298 = pneg %p49
        %s299 = sand.u32 %s67, 1
        %s300 = sand.u32 %s67, 1
        %s301 = smul.addr %s300, 16
        %s302 = scalar_lea.vmem [#allocation2], %s301
        %p303 = pneg %p80
        %p304 = pneg %p77
        %p305 = pneg %p106
        %p306 = pneg %p103
        %p307 = scmp.lt.s32.totalorder %s21, 1
        %s308 = scalar_select %p307, %s21, 1
        %s309 = smul.addr %s308, 4
        %s310 = smul.addr %s309, 8
        %s311 = scalar_lea.vmem %s2, %s310
        %p312 = pneg %p132
        %p313 = pneg %p129
        %p314 = scmp.lt.s32.totalorder %s21, 1
        %s315 = scalar_select %p314, %s21, 1
        %s316 = smul.addr %s315, 4
        %s317 = smul.addr %s316, 8
        %s318 = scalar_lea.vmem %s3, %s317
        %p319 = pneg %p158
        %p320 = pneg %p155
        %p321 = scmp.lt.s32.totalorder %s21, 1
        %s322 = scalar_select %p321, %s21, 1
        %s323 = scalar_lea.vmem %s4, %s322
        %p324 = pneg %p184
        %p325 = pneg %p181
        %p326 = scmp.lt.s32.totalorder %s21, 1
        %s327 = scalar_select %p326, %s21, 1
        %s328 = scalar_lea.vmem %s5, %s327
        %s329 = sadd.s32 %s21, %s22
        %s330 = smul.u32 16, %s329
        %p331 = scmp.lt.s32.totalorder %s330, 31
        %s332 = scalar_select %p331, %s330, 31
        %s333 = smul.addr %s332, 8
        %s334 = scalar_lea.vmem %s0, %s333
        %s335 = sadd.s32 %s21, %s22
        %s336 = smul.u32 16, %s335
        %s337 = sadd.s32 %s21, %s22
        %p338 = scmp.lt.s32.totalorder %s21, 1
        %s339 = scalar_select %p338, %s21, 1
        %s340 = smul.addr %s339, 4
        %s341 = smul.addr %s340, 8
        %s342 = scalar_lea.vmem %s2, %s341
        %p343 = scmp.lt.s32.totalorder %s21, 1
        %s344 = scalar_select %p343, %s21, 1
        %s345 = smul.addr %s344, 4
        %s346 = smul.addr %s345, 8
        %s347 = scalar_lea.vmem %s3, %s346
        %p348 = scmp.lt.s32.totalorder %s21, 1
        %s349 = scalar_select %p348, %s21, 1
        %s350 = scalar_lea.vmem %s4, %s349
        %p351 = scmp.lt.s32.totalorder %s21, 1
        %s352 = scalar_select %p351, %s21, 1
        %s353 = scalar_lea.vmem %s5, %s352
        %p354 = scmp.eq.s32.totalorder %s22, 0
        // Predicated region
        $region70: #{hgnn_weight_forward.3} parent=64 // pred_check
          %p355 = pneg %p354
        $region71: #{hgnn_weight_forward.3} parent=64 // pred_check_branch
          %357 = sbr.rel (%p355) target = $region73
        $region72: #{hgnn_weight_forward.3} parent=64 // pred_region
          %vm358 = vcmask 130048
          %359 = vst.msk [vmem:[%s342] sm:$0xff] %vm358, 0.0
          %360 = vst.msk [vmem:[%s342 + $0x8] sm:$0xff] %vm358, 0.0
          %361 = vst.msk [vmem:[%s342 + $0x10] sm:$0xff] %vm358, 0.0
          %362 = vst.msk [vmem:[%s342 + $0x18] sm:$0xff] %vm358, 0.0
          %vm363 = vcmask 7168
          %364 = vst.msk [vmem:[%s347] sm:$0xff] %vm363, 0.0
          %365 = vst.msk [vmem:[%s347 + $0x8] sm:$0xff] %vm363, 0.0
          %366 = vst.msk [vmem:[%s347 + $0x10] sm:$0xff] %vm363, 0.0
          %367 = vst.msk [vmem:[%s347 + $0x18] sm:$0xff] %vm363, 0.0
          %vm368 = vcmask 122880
          %369 = vst.msk [vmem:[%s350] sm:$0x1] %vm368, 0.0
          %370 = vst.msk [vmem:[%s353] sm:$0x1] %vm368, 0.0
        $region73: #{hgnn_weight_forward.3} parent=64 // pred_fallthru
          _
        %v371 = vld [vmem:[%s334] sm:$0xff]
        %v372 = vld [vmem:[%s334 + $0x8] sm:$0xff]
        %v373 = vld [vmem:[%s334 + $0x10] sm:$0xff]
        %v374 = vld [vmem:[%s334 + $0x18] sm:$0xff]
        %v375 = vld [vmem:[%s334 + $0x20] sm:$0xff]
        %v376 = vld [vmem:[%s334 + $0x28] sm:$0xff]
        %v377 = vld [vmem:[%s334 + $0x30] sm:$0xff]
        %v378 = vld [vmem:[%s334 + $0x38] sm:$0xff]
        %v379 = vld [vmem:[%s334 + $0x40] sm:$0xff]
        %v380 = vld [vmem:[%s334 + $0x48] sm:$0xff]
        %v381 = vld [vmem:[%s334 + $0x50] sm:$0xff]
        %v382 = vld [vmem:[%s334 + $0x58] sm:$0xff]
        %v383 = vld [vmem:[%s334 + $0x60] sm:$0xff]
        %v384 = vld [vmem:[%s334 + $0x68] sm:$0xff]
        %v385 = vld [vmem:[%s334 + $0x70] sm:$0xff]
        %v386 = vld [vmem:[%s334 + $0x78] sm:$0xff]
        %v387 = vld [vmem:[%s287] sm:$0xf]
        %v388 = vld [vmem:[%s287 + $0x4] sm:$0xf]
        %v389 = vld [vmem:[%s287 + $0x8] sm:$0xf]
        %v390 = vld [vmem:[%s287 + $0xc] sm:$0xf]
        %v391 = vunpack.c.l.bf16 %v387
        %v392 = vunpack.c.l.bf16 %v388
        %v393 = vunpack.c.l.bf16 %v389
        %v394 = vunpack.c.l.bf16 %v390
        %v395 = vld [vmem:[%s350] sm:$0x1]
        %vm396 = vcmask 130048
        %v397 = vsel %vm396, %v371, 0.0
        %v398 = vsel %vm396, %v372, 0.0
        %v399 = vadd.f32 %v397, %v398
        %v400 = vsel %vm396, %v373, 0.0
        %v401 = vadd.f32 %v399, %v400
        %v402 = vsel %vm396, %v374, 0.0
        %v403 = vadd.f32 %v401, %v402
        %v404 = vsel %vm396, %v375, 0.0
        %v405 = vadd.f32 %v403, %v404
        %v406 = vsel %vm396, %v376, 0.0
        %v407 = vadd.f32 %v405, %v406
        %v408 = vsel %vm396, %v377, 0.0
        %v409 = vadd.f32 %v407, %v408
        %v410 = vsel %vm396, %v378, 0.0
        %v411 = vadd.f32 %v409, %v410
        %v412 = vsel %vm396, %v379, 0.0
        %v413 = vadd.f32 %v411, %v412
        %v414 = vsel %vm396, %v380, 0.0
        %v415 = vadd.f32 %v413, %v414
        %v416 = vsel %vm396, %v381, 0.0
        %v417 = vadd.f32 %v415, %v416
        %v418 = vsel %vm396, %v382, 0.0
        %v419 = vadd.f32 %v417, %v418
        %v420 = vsel %vm396, %v383, 0.0
        %v421 = vadd.f32 %v419, %v420
        %v422 = vsel %vm396, %v384, 0.0
        %v423 = vadd.f32 %v421, %v422
        %v424 = vsel %vm396, %v385, 0.0
        %v425 = vadd.f32 %v423, %v424
        %v426 = vsel %vm396, %v386, 0.0
        %v427 = vadd.f32 %v425, %v426
        %v428 = vrot.slane %v427, 4
        %v429 = vadd.f32 %v427, %v428
        %v430 = vrot.slane %v429, 2
        %v431 = vadd.f32 %v429, %v430
        %v432 = vrot.slane %v431, 1
        %v433 = vadd.f32 %v431, %v432
        %v434 = vadd.f32 %v395, %v433
        %vm435 = vcmask 122880
        %436 = vst.msk [vmem:[%s350] sm:$0x1] %vm435, %v434
        %v437 = vld [vmem:[%s353] sm:$0x1]
        %v438 = vmul.f32 %v371, %v371
        %v439 = vmul.f32 %v372, %v372
        %v440 = vmul.f32 %v373, %v373
        %v441 = vmul.f32 %v374, %v374
        %v442 = vmul.f32 %v375, %v375
        %v443 = vmul.f32 %v376, %v376
        %v444 = vmul.f32 %v377, %v377
        %v445 = vmul.f32 %v378, %v378
        %v446 = vmul.f32 %v379, %v379
        %v447 = vmul.f32 %v380, %v380
        %v448 = vmul.f32 %v381, %v381
        %v449 = vmul.f32 %v382, %v382
        %v450 = vmul.f32 %v383, %v383
        %v451 = vmul.f32 %v384, %v384
        %v452 = vmul.f32 %v385, %v385
        %v453 = vmul.f32 %v386, %v386
        %v454 = vsel %vm396, %v438, 0.0
        %v455 = vsel %vm396, %v439, 0.0
        %v456 = vadd.f32 %v454, %v455
        %v457 = vsel %vm396, %v440, 0.0
        %v458 = vadd.f32 %v456, %v457
        %v459 = vsel %vm396, %v441, 0.0
        %v460 = vadd.f32 %v458, %v459
        %v461 = vsel %vm396, %v442, 0.0
        %v462 = vadd.f32 %v460, %v461
        %v463 = vsel %vm396, %v443, 0.0
        %v464 = vadd.f32 %v462, %v463
        %v465 = vsel %vm396, %v444, 0.0
        %v466 = vadd.f32 %v464, %v465
        %v467 = vsel %vm396, %v445, 0.0
        %v468 = vadd.f32 %v466, %v467
        %v469 = vsel %vm396, %v446, 0.0
        %v470 = vadd.f32 %v468, %v469
        %v471 = vsel %vm396, %v447, 0.0
        %v472 = vadd.f32 %v470, %v471
        %v473 = vsel %vm396, %v448, 0.0
        %v474 = vadd.f32 %v472, %v473
        %v475 = vsel %vm396, %v449, 0.0
        %v476 = vadd.f32 %v474, %v475
        %v477 = vsel %vm396, %v450, 0.0
        %v478 = vadd.f32 %v476, %v477
        %v479 = vsel %vm396, %v451, 0.0
        %v480 = vadd.f32 %v478, %v479
        %v481 = vsel %vm396, %v452, 0.0
        %v482 = vadd.f32 %v480, %v481
        %v483 = vsel %vm396, %v453, 0.0
        %v484 = vadd.f32 %v482, %v483
        %v485 = vrot.slane %v484, 4
        %v486 = vadd.f32 %v484, %v485
        %v487 = vrot.slane %v486, 2
        %v488 = vadd.f32 %v486, %v487
        %v489 = vrot.slane %v488, 1
        %v490 = vadd.f32 %v488, %v489
        %v491 = vadd.f32 %v437, %v490
        %492 = vst.msk [vmem:[%s353] sm:$0x1] %vm435, %v491
        %v493 = vld [vmem:[%s347] sm:$0xff]
        %v494 = vld [vmem:[%s347 + $0x8] sm:$0xff]
        %v495 = vld [vmem:[%s347 + $0x10] sm:$0xff]
        %v496 = vld [vmem:[%s347 + $0x18] sm:$0xff]
        %497 = vadd.xlane.f32.xlu0 %v391
        %v498 = vpop.xlane.xlu0 %497
        %499 = vadd.xlane.f32.xlu0 %v392
        %v500 = vpop.xlane.xlu0 %499
        %501 = vadd.xlane.f32.xlu0 %v393
        %v502 = vpop.xlane.xlu0 %501
        %503 = vadd.xlane.f32.xlu0 %v394
        %v504 = vpop.xlane.xlu0 %503
        %v505 = vadd.f32 %v493, %v498
        %v506 = vadd.f32 %v494, %v500
        %v507 = vadd.f32 %v495, %v502
        %v508 = vadd.f32 %v496, %v504
        %vm509 = vcmask 7168
        %510 = vst.msk [vmem:[%s347] sm:$0xff] %vm509, %v505
        %511 = vst.msk [vmem:[%s347 + $0x8] sm:$0xff] %vm509, %v506
        %512 = vst.msk [vmem:[%s347 + $0x10] sm:$0xff] %vm509, %v507
        %513 = vst.msk [vmem:[%s347 + $0x18] sm:$0xff] %vm509, %v508
        %v514 = vld [vmem:[%s342] sm:$0xff]
        %v515 = vld [vmem:[%s342 + $0x8] sm:$0xff]
        %v516 = vld [vmem:[%s342 + $0x10] sm:$0xff]
        %v517 = vld [vmem:[%s342 + $0x18] sm:$0xff]
        %518 = vmatpush.msra.mxu0 %v386
        %519 = vmatpush.msra.mxu0 %v385
        %520 = vmatpush.msra.mxu0 %v384
        %521 = vmatpush.msra.mxu0 %v383
        %522 = vmatpush.msra.mxu0 %v382
        %523 = vmatpush.msra.mxu0 %v381
        %524 = vmatpush.msra.mxu0 %v380
        %525 = vmatpush.msra.mxu0 %v379
        %526 = vmatpush.msra.mxu0 %v378
        %527 = vmatpush.msra.mxu0 %v377
        %528 = vmatpush.msra.mxu0 %v376
        %529 = vmatpush.msra.mxu0 %v375
        %530 = vmatpush.msra.mxu0 %v374
        %531 = vmatpush.msra.mxu0 %v373
        %532 = vmatpush.msra.mxu0 %v372
        %533 = vmatpush.msra.mxu0 %v371
        %534 = vmatmul.f32.gmra.mxu0 %v391
        %v535 = vpop.f32.mrf.mxu0
        %v536 = vadd.f32 0.0, %v535
        %537 = vmatmul.f32.gmra.mxu0 %v392
        %v538 = vpop.f32.mrf.mxu0
        %v539 = vadd.f32 0.0, %v538
        %540 = vmatmul.f32.gmra.mxu0 %v393
        %v541 = vpop.f32.mrf.mxu0
        %v542 = vadd.f32 0.0, %v541
        %543 = vmatmul.f32.gmra.mxu0 %v394
        %v544 = vpop.f32.mrf.mxu0
        %v545 = vadd.f32 0.0, %v544
        %546 = vdwg.mxu0
        %v547 = vadd.f32 %v514, %v536
        %v548 = vadd.f32 %v515, %v539
        %v549 = vadd.f32 %v516, %v542
        %v550 = vadd.f32 %v517, %v545
        %551 = vst.msk [vmem:[%s342] sm:$0xff] %vm396, %v547
        %552 = vst.msk [vmem:[%s342 + $0x8] sm:$0xff] %vm396, %v548
        %553 = vst.msk [vmem:[%s342 + $0x10] sm:$0xff] %vm396, %v549
        %554 = vst.msk [vmem:[%s342 + $0x18] sm:$0xff] %vm396, %v550
        %p555 = scmp.lt.s32.totalorder %s21, 1
        %s556 = scalar_select %p555, %s21, 1
        %s557 = smul.addr %s556, 4
        %s558 = smul.addr %s557, 8
        %s559 = scalar_lea.vmem %s2, %s558
        %p560 = scmp.lt.s32.totalorder %s21, 1
        %s561 = scalar_select %p560, %s21, 1
        %s562 = smul.addr %s561, 4
        %s563 = smul.addr %s562, 8
        %s564 = scalar_lea.vmem %s3, %s563
        %p565 = scmp.lt.s32.totalorder %s21, 1
        %s566 = scalar_select %p565, %s21, 1
        %s567 = scalar_lea.vmem %s4, %s566
        %p568 = scmp.lt.s32.totalorder %s21, 1
        %s569 = scalar_select %p568, %s21, 1
        %s570 = scalar_lea.vmem %s5, %s569
        // Predicated region
        $region74: #{hgnn_weight_forward.3} parent=64 // pred_check
          %p571 = pneg %p103
        $region75: #{hgnn_weight_forward.3} parent=64 // pred_check_branch
          %573 = sbr.rel (%p571) target = $region77
        $region76: #{hgnn_weight_forward.3} parent=64 // pred_region
          _
        $region77: #{hgnn_weight_forward.3} parent=64 // pred_fallthru
          _
        // Predicated region
        $region78: #{hgnn_weight_forward.3} parent=64 // pred_check
          %p574 = pneg %p129
        $region79: #{hgnn_weight_forward.3} parent=64 // pred_check_branch
          %576 = sbr.rel (%p574) target = $region81
        $region80: #{hgnn_weight_forward.3} parent=64 // pred_region
          _
        $region81: #{hgnn_weight_forward.3} parent=64 // pred_fallthru
          _
        // Predicated region
        $region82: #{hgnn_weight_forward.3} parent=64 // pred_check
          %p577 = pneg %p155
        $region83: #{hgnn_weight_forward.3} parent=64 // pred_check_branch
          %579 = sbr.rel (%p577) target = $region85
        $region84: #{hgnn_weight_forward.3} parent=64 // pred_region
          _
        $region85: #{hgnn_weight_forward.3} parent=64 // pred_fallthru
          _
        // Predicated region
        $region86: #{hgnn_weight_forward.3} parent=64 // pred_check
          %p580 = pneg %p181
        $region87: #{hgnn_weight_forward.3} parent=64 // pred_check_branch
          %582 = sbr.rel (%p580) target = $region89
        $region88: #{hgnn_weight_forward.3} parent=64 // pred_region
          _
        $region89: #{hgnn_weight_forward.3} parent=64 // pred_fallthru
          _
      $region65: #{hgnn_weight_forward.3} parent=5 // pred_fallthru
        _
      %p583 = scmp.le.s32.totalorder 2, %s12
      // Predicated region
      $region90: #{hgnn_weight_forward.3} parent=5 // pred_check
        %p584 = pneg %p583
      $region91: #{hgnn_weight_forward.3} parent=5 // pred_check_branch
        %586 = sbr.rel (%p584) target = $region93
      $region92: #{hgnn_weight_forward.3} parent=5 // pred_region
        %s587 = ssub.s32 %s12, 2
        // Predicated region
        $region94: #{hgnn_weight_forward.3} parent=92 // pred_check
          %p588 = pneg %p109
        $region95: #{hgnn_weight_forward.3} parent=92 // pred_check_branch
          %590 = sbr.rel (%p588) target = $region97
        $region96: #{hgnn_weight_forward.3} parent=92 // pred_region
          %p591 = scmp.lt.s32.totalorder %s23, 1
          %s592 = scalar_select %p591, %s23, 1
          %s593 = smul.addr %s592, 4
          %s594 = smul.addr %s593, 8
          %s595 = scalar_lea.vmem %s2, %s594
        $region97: #{hgnn_weight_forward.3} parent=92 // pred_fallthru
          _
        // Predicated region
        $region98: #{hgnn_weight_forward.3} parent=92 // pred_check
          %p596 = pneg %p135
        $region99: #{hgnn_weight_forward.3} parent=92 // pred_check_branch
          %598 = sbr.rel (%p596) target = $region101
        $region100: #{hgnn_weight_forward.3} parent=92 // pred_region
          %p599 = scmp.lt.s32.totalorder %s23, 1
          %s600 = scalar_select %p599, %s23, 1
          %s601 = smul.addr %s600, 4
          %s602 = smul.addr %s601, 8
          %s603 = scalar_lea.vmem %s3, %s602
        $region101: #{hgnn_weight_forward.3} parent=92 // pred_fallthru
          _
        // Predicated region
        $region102: #{hgnn_weight_forward.3} parent=92 // pred_check
          %p604 = pneg %p161
        $region103: #{hgnn_weight_forward.3} parent=92 // pred_check_branch
          %606 = sbr.rel (%p604) target = $region105
        $region104: #{hgnn_weight_forward.3} parent=92 // pred_region
          %p607 = scmp.lt.s32.totalorder %s23, 1
          %s608 = scalar_select %p607, %s23, 1
          %s609 = scalar_lea.vmem %s4, %s608
        $region105: #{hgnn_weight_forward.3} parent=92 // pred_fallthru
          _
        // Predicated region
        $region106: #{hgnn_weight_forward.3} parent=92 // pred_check
          %p610 = pneg %p187
        $region107: #{hgnn_weight_forward.3} parent=92 // pred_check_branch
          %612 = sbr.rel (%p610) target = $region109
        $region108: #{hgnn_weight_forward.3} parent=92 // pred_region
          %p613 = scmp.lt.s32.totalorder %s23, 1
          %s614 = scalar_select %p613, %s23, 1
          %s615 = scalar_lea.vmem %s5, %s614
        $region109: #{hgnn_weight_forward.3} parent=92 // pred_fallthru
          _
      $region93: #{hgnn_weight_forward.3} parent=5 // pred_fallthru
        _
    $region6: #{hgnn_weight_forward.3} parent=1 // loop_footer
      %s16 = sadd.s32 1, %s12
    $region7: #{hgnn_weight_forward.3} parent=1 // loop_footer_branch
      %11 = sbr.rel target = $region3
    $region8: #{hgnn_weight_forward.3} parent=1 // loop_exit
      _

// kernel: hgnn_weight_forward.4
$region0: #{hgnn_weight_forward.4}
  #allocation0 [shape = 'u32[]', space=smem, size = 0x4, offset = 0x4, fixed_abs, tag = 'smem constant byte address 0x4 - core index']
  #allocation1 [shape = 'u32[72,128]{1,0:T(1,128)}', space=vmem, size = 0x9000, scoped, tag = 'internal scratch']
  %s0 = inlined_call_operand.vmem [shape: f32[2,32,16], index: 0, kind: input, shape index: {}]
  %s1 = inlined_call_operand.vmem [shape: f32[2,32,1], index: 1, kind: input, shape index: {}]
  %s2 = inlined_call_operand.vmem [shape: f32[2,1,16], index: 2, kind: input, shape index: {}]
  %s3 = inlined_call_operand.vmem [shape: f32[2,1,16], index: 3, kind: input, shape index: {}]
  %s4 = inlined_call_operand.vmem [shape: f32[32,32], index: 4, kind: input, shape index: {}]
  %s5 = inlined_call_operand.vmem [shape: f32[16,32], index: 5, kind: input, shape index: {}]
  %s6 = inlined_call_operand.vmem [shape: f32[1,32], index: 6, kind: input, shape index: {}]
  %s7 = inlined_call_operand.vmem [shape: f32[32,8], index: 7, kind: input, shape index: {}]
  %s8 = inlined_call_operand.vmem [shape: f32[1,8], index: 8, kind: input, shape index: {}]
  %s9 = inlined_call_operand.vmem [shape: f32[1,16], index: 9, kind: input, shape index: {}]
  %s10 = inlined_call_operand.vmem [shape: f32[1,16], index: 10, kind: input, shape index: {}]
  %s11 = inlined_call_operand.vmem [shape: f32[1,32], index: 11, kind: input, shape index: {}]
  %s12 = inlined_call_operand.vmem [shape: f32[1,32], index: 12, kind: input, shape index: {}]
  %s13 = inlined_call_operand.vmem [shape: f32[8,32], index: 13, kind: output, shape index: {}]
  %s14 = sld [smem:[#allocation0]]
  $region62: #{hgnn_weight_forward.4} parent=0
    _
  %s16 = ssub.s32 1, %s14
  %s17 = scalar_select 0, %s16, %s14
  // Predicated region
  $region2: #{hgnn_weight_forward.4} parent=0 // pred_check
    _
  $region3: #{hgnn_weight_forward.4} parent=0 // pred_check_branch
    %19 = sbr.rel (0) target = $region5
  $region4: #{hgnn_weight_forward.4} parent=0 // pred_region
    _
  $region5: #{hgnn_weight_forward.4} parent=0 // pred_fallthru
    _
  // Predicated region
  $region6: #{hgnn_weight_forward.4} parent=0 // pred_check
    _
  $region7: #{hgnn_weight_forward.4} parent=0 // pred_check_branch
    %21 = sbr.rel (0) target = $region9
  $region8: #{hgnn_weight_forward.4} parent=0 // pred_region
    _
  $region9: #{hgnn_weight_forward.4} parent=0 // pred_fallthru
    _
  // Predicated region
  $region10: #{hgnn_weight_forward.4} parent=0 // pred_check
    _
  $region11: #{hgnn_weight_forward.4} parent=0 // pred_check_branch
    %23 = sbr.rel (0) target = $region13
  $region12: #{hgnn_weight_forward.4} parent=0 // pred_region
    _
  $region13: #{hgnn_weight_forward.4} parent=0 // pred_fallthru
    _
  // Predicated region
  $region14: #{hgnn_weight_forward.4} parent=0 // pred_check
    _
  $region15: #{hgnn_weight_forward.4} parent=0 // pred_check_branch
    %25 = sbr.rel (0) target = $region17
  $region16: #{hgnn_weight_forward.4} parent=0 // pred_region
    _
  $region17: #{hgnn_weight_forward.4} parent=0 // pred_fallthru
    _
  // Predicated region
  $region18: #{hgnn_weight_forward.4} parent=0 // pred_check
    _
  $region19: #{hgnn_weight_forward.4} parent=0 // pred_check_branch
    %27 = sbr.rel (0) target = $region21
  $region20: #{hgnn_weight_forward.4} parent=0 // pred_region
    _
  $region21: #{hgnn_weight_forward.4} parent=0 // pred_fallthru
    _
  // Predicated region
  $region22: #{hgnn_weight_forward.4} parent=0 // pred_check
    _
  $region23: #{hgnn_weight_forward.4} parent=0 // pred_check_branch
    %29 = sbr.rel (0) target = $region25
  $region24: #{hgnn_weight_forward.4} parent=0 // pred_region
    _
  $region25: #{hgnn_weight_forward.4} parent=0 // pred_fallthru
    _
  // Predicated region
  $region26: #{hgnn_weight_forward.4} parent=0 // pred_check
    _
  $region27: #{hgnn_weight_forward.4} parent=0 // pred_check_branch
    %31 = sbr.rel (0) target = $region29
  $region28: #{hgnn_weight_forward.4} parent=0 // pred_region
    _
  $region29: #{hgnn_weight_forward.4} parent=0 // pred_fallthru
    _
  // Predicated region
  $region30: #{hgnn_weight_forward.4} parent=0 // pred_check
    _
  $region31: #{hgnn_weight_forward.4} parent=0 // pred_check_branch
    %33 = sbr.rel (0) target = $region33
  $region32: #{hgnn_weight_forward.4} parent=0 // pred_region
    _
  $region33: #{hgnn_weight_forward.4} parent=0 // pred_fallthru
    _
  // Predicated region
  $region34: #{hgnn_weight_forward.4} parent=0 // pred_check
    _
  $region35: #{hgnn_weight_forward.4} parent=0 // pred_check_branch
    %35 = sbr.rel (0) target = $region37
  $region36: #{hgnn_weight_forward.4} parent=0 // pred_region
    _
  $region37: #{hgnn_weight_forward.4} parent=0 // pred_fallthru
    _
  // Predicated region
  $region38: #{hgnn_weight_forward.4} parent=0 // pred_check
    _
  $region39: #{hgnn_weight_forward.4} parent=0 // pred_check_branch
    %37 = sbr.rel (0) target = $region41
  $region40: #{hgnn_weight_forward.4} parent=0 // pred_region
    _
  $region41: #{hgnn_weight_forward.4} parent=0 // pred_fallthru
    _
  // Predicated region
  $region42: #{hgnn_weight_forward.4} parent=0 // pred_check
    _
  $region43: #{hgnn_weight_forward.4} parent=0 // pred_check_branch
    %39 = sbr.rel (0) target = $region45
  $region44: #{hgnn_weight_forward.4} parent=0 // pred_region
    _
  $region45: #{hgnn_weight_forward.4} parent=0 // pred_fallthru
    _
  // Predicated region
  $region46: #{hgnn_weight_forward.4} parent=0 // pred_check
    _
  $region47: #{hgnn_weight_forward.4} parent=0 // pred_check_branch
    %41 = sbr.rel (0) target = $region49
  $region48: #{hgnn_weight_forward.4} parent=0 // pred_region
    _
  $region49: #{hgnn_weight_forward.4} parent=0 // pred_fallthru
    _
  // Predicated region
  $region50: #{hgnn_weight_forward.4} parent=0 // pred_check
    _
  $region51: #{hgnn_weight_forward.4} parent=0 // pred_check_branch
    %43 = sbr.rel (0) target = $region53
  $region52: #{hgnn_weight_forward.4} parent=0 // pred_region
    _
  $region53: #{hgnn_weight_forward.4} parent=0 // pred_fallthru
    _
  %v44 = vld [vmem:[%s0] sm:$0xff]
  %v45 = vld [vmem:[%s0 + $0x8] sm:$0xff]
  %v46 = vld [vmem:[%s0 + $0x10] sm:$0xff]
  %v47 = vld [vmem:[%s0 + $0x18] sm:$0xff]
  %v48 = vld [vmem:[%s0 + $0x20] sm:$0xff]
  %v49 = vld [vmem:[%s0 + $0x28] sm:$0xff]
  %v50 = vld [vmem:[%s0 + $0x30] sm:$0xff]
  %v51 = vld [vmem:[%s0 + $0x38] sm:$0xff]
  %vm52 = vcmask 130048
  %v53 = vsel %vm52, %v44, 0.0
  %v54 = vsel %vm52, %v48, 0.0
  %v55 = vadd.f32 %v53, %v54
  %v56 = vsel %vm52, %v45, 0.0
  %v57 = vsel %vm52, %v49, 0.0
  %v58 = vadd.f32 %v56, %v57
  %v59 = vsel %vm52, %v46, 0.0
  %v60 = vsel %vm52, %v50, 0.0
  %v61 = vadd.f32 %v59, %v60
  %v62 = vsel %vm52, %v47, 0.0
  %v63 = vsel %vm52, %v51, 0.0
  %v64 = vadd.f32 %v62, %v63
  %v65 = vld [vmem:[%s1] sm:$0xff]
  %v66 = vld [vmem:[%s1 + $0x8] sm:$0xff]
  %v67 = vld [vmem:[%s1 + $0x10] sm:$0xff]
  %v68 = vld [vmem:[%s1 + $0x18] sm:$0xff]
  %v69 = vld [vmem:[%s1 + $0x20] sm:$0xff]
  %v70 = vld [vmem:[%s1 + $0x28] sm:$0xff]
  %v71 = vld [vmem:[%s1 + $0x30] sm:$0xff]
  %v72 = vld [vmem:[%s1 + $0x38] sm:$0xff]
  %vm73 = vcmask 7168
  %v74 = vsel %vm73, %v65, 0.0
  %v75 = vsel %vm73, %v69, 0.0
  %v76 = vadd.f32 %v74, %v75
  %v77 = vsel %vm73, %v66, 0.0
  %v78 = vsel %vm73, %v70, 0.0
  %v79 = vadd.f32 %v77, %v78
  %v80 = vsel %vm73, %v67, 0.0
  %v81 = vsel %vm73, %v71, 0.0
  %v82 = vadd.f32 %v80, %v81
  %v83 = vsel %vm73, %v68, 0.0
  %v84 = vsel %vm73, %v72, 0.0
  %v85 = vadd.f32 %v83, %v84
  %v86 = vld [vmem:[%s2] sm:$0x1]
  %v87 = vld [vmem:[%s2 + $0x1] sm:$0x1]
  %vm88 = vcmask 122880
  %v89 = vsel %vm88, %v86, 0.0
  %v90 = vsel %vm88, %v87, 0.0
  %v91 = vadd.f32 %v89, %v90
  %v92 = vld [vmem:[%s3] sm:$0x1]
  %v93 = vld [vmem:[%s3 + $0x1] sm:$0x1]
  %v94 = vsel %vm88, %v92, 0.0
  %v95 = vsel %vm88, %v93, 0.0
  %v96 = vadd.f32 %v94, %v95
  %v97 = vmul.f32 %v91, 0.015625
  %v98 = vmul.f32 %v96, 0.015625
  %v99 = vmul.f32 %v97, %v97
  %v100 = vsub.f32 %v98, %v99
  %v101 = vmax.f32 %v100, 0.0
  %v102 = vld [vmem:[%s9] sm:$0x1]
  %v103 = vadd.f32 %v101, 1e-05
  %v104 = vrsqrt.pop %v103
  %v105 = vmul.f32 %v104, %v103
  %v106 = vmul.f32 %v105, %v104
  %v107 = vmul.f32 0.5, %v106
  %v108 = vsub.f32 1.5, %v107
  %v109 = vmul.f32 %v104, %v108
  %vm110 = vweird.f32 %v103
  %vm111 = vweird.f32 %v104
  %vm112 = vmor %vm110, %vm111
  %v113 = vsel %vm112, %v104, %v109
  %v114 = vmul.f32 %v102, %v113
  %v115 = vld [vmem:[%s10] sm:$0x1]
  %v116 = vmul.f32 %v97, %v114
  %v117 = vsub.f32 %v115, %v116
  %v118 = vrcp.pop %v76
  %v119 = vmul.f32 %v76, %v118
  %v120 = vsub.f32 1.0, %v119
  %v121 = vmul.f32 %v118, %v120
  %v122 = vadd.f32 %v118, %v121
  %vm123 = vweird.f32 %v76
  %vm124 = vweird.f32 %v118
  %vm125 = vmor %vm123, %vm124
  %v126 = vsel %vm125, %v118, %v122
  %v127 = vand.u32 2147483647, %v76
  %vm128 = vcmp.eq.f32.partialorder %v127, 8.507059e+37
  %v129 = vand.u32 %v76, 2147483648
  %v130 = vor.u32 1.1754944e-38, %v129
  %v131 = vsel %vm128, %v130, %v126
  %v132 = vmul.f32 1.0, %v131
  %v133 = vrcp.pop %v79
  %v134 = vmul.f32 %v79, %v133
  %v135 = vsub.f32 1.0, %v134
  %v136 = vmul.f32 %v133, %v135
  %v137 = vadd.f32 %v133, %v136
  %vm138 = vweird.f32 %v79
  %vm139 = vweird.f32 %v133
  %vm140 = vmor %vm138, %vm139
  %v141 = vsel %vm140, %v133, %v137
  %v142 = vand.u32 2147483647, %v79
  %vm143 = vcmp.eq.f32.partialorder %v142, 8.507059e+37
  %v144 = vand.u32 %v79, 2147483648
  %v145 = vor.u32 1.1754944e-38, %v144
  %v146 = vsel %vm143, %v145, %v141
  %v147 = vmul.f32 1.0, %v146
  %v148 = vrcp.pop %v82
  %v149 = vmul.f32 %v82, %v148
  %v150 = vsub.f32 1.0, %v149
  %v151 = vmul.f32 %v148, %v150
  %v152 = vadd.f32 %v148, %v151
  %vm153 = vweird.f32 %v82
  %vm154 = vweird.f32 %v148
  %vm155 = vmor %vm153, %vm154
  %v156 = vsel %vm155, %v148, %v152
  %v157 = vand.u32 2147483647, %v82
  %vm158 = vcmp.eq.f32.partialorder %v157, 8.507059e+37
  %v159 = vand.u32 %v82, 2147483648
  %v160 = vor.u32 1.1754944e-38, %v159
  %v161 = vsel %vm158, %v160, %v156
  %v162 = vmul.f32 1.0, %v161
  %v163 = vrcp.pop %v85
  %v164 = vmul.f32 %v85, %v163
  %v165 = vsub.f32 1.0, %v164
  %v166 = vmul.f32 %v163, %v165
  %v167 = vadd.f32 %v163, %v166
  %vm168 = vweird.f32 %v85
  %vm169 = vweird.f32 %v163
  %vm170 = vmor %vm168, %vm169
  %v171 = vsel %vm170, %v163, %v167
  %v172 = vand.u32 2147483647, %v85
  %vm173 = vcmp.eq.f32.partialorder %v172, 8.507059e+37
  %v174 = vand.u32 %v85, 2147483648
  %v175 = vor.u32 1.1754944e-38, %v174
  %v176 = vsel %vm173, %v175, %v171
  %v177 = vmul.f32 1.0, %v176
  %179 = vset.pattern.permute.xlu0 0
  %180 = vperm.xlu0 %179, %v132
  %v181 = vpop.permute.xlu0 %180
  %184 = vset.pattern.permute.xlu0 0
  %185 = vperm.xlu0 %184, %v147
  %v186 = vpop.permute.xlu0 %185
  %189 = vset.pattern.permute.xlu0 0
  %190 = vperm.xlu0 %189, %v162
  %v191 = vpop.permute.xlu0 %190
  %194 = vset.pattern.permute.xlu0 0
  %195 = vperm.xlu0 %194, %v177
  %v196 = vpop.permute.xlu0 %195
  %v198 = vmul.f32 %v55, %v181
  %v199 = vmul.f32 %v58, %v186
  %v200 = vmul.f32 %v61, %v191
  %v201 = vmul.f32 %v64, %v196
  %v203 = vperm.slane %v114, 0
  %v205 = vmul.f32 %v198, %v203
  %v206 = vmul.f32 %v199, %v203
  %v207 = vmul.f32 %v200, %v203
  %v208 = vmul.f32 %v201, %v203
  %v210 = vperm.slane %v117, 0
  %v212 = vadd.f32 %v205, %v210
  %v213 = vadd.f32 %v206, %v210
  %v214 = vadd.f32 %v207, %v210
  %v215 = vadd.f32 %v208, %v210
  %v216 = vld [vmem:[%s4] sm:$0xff]
  %v217 = vld [vmem:[%s4 + $0x8] sm:$0xff]
  %v218 = vld [vmem:[%s4 + $0x10] sm:$0xff]
  %v219 = vld [vmem:[%s4 + $0x18] sm:$0xff]
  %v220 = vld [vmem:[%s5] sm:$0xff]
  %v221 = vld [vmem:[%s5 + $0x8] sm:$0xff]
  %v222 = vld [vmem:[%s6] sm:$0x1]
  %v224 = vperm.slane %v222, 0
  %v227 = vsel %vm52, %v212, 0
  %v230 = vsel %vm52, %v213, 0
  %v233 = vsel %vm52, %v214, 0
  %v236 = vsel %vm52, %v215, 0
  %238 = vmatpush.msra.mxu0 0.0
  %239 = vmatpush.msra.mxu0 0.0
  %240 = vmatpush.msra.mxu0 0.0
  %241 = vmatpush.msra.mxu0 0.0
  %242 = vmatpush.msra.mxu0 0.0
  %243 = vmatpush.msra.mxu0 0.0
  %244 = vmatpush.msra.mxu0 0.0
  %245 = vmatpush.msra.mxu0 0.0
  %246 = vmatpush.msra.mxu0 0.0
  %247 = vmatpush.msra.mxu0 0.0
  %248 = vmatpush.msra.mxu0 0.0
  %249 = vmatpush.msra.mxu0 0.0
  %250 = vmatpush.msra.mxu0 0.0
  %251 = vmatpush.msra.mxu0 0.0
  %252 = vmatpush.msra.mxu0 %v221
  %253 = vmatpush.msra.mxu0 %v220
  %254 = vmatmul.f32.gmra.mxu0 %v227
  %v255 = vpop.f32.mrf.mxu0
  %v256 = vadd.f32 %v224, %v255
  %257 = vmatmul.f32.gmra.mxu0 %v230
  %v258 = vpop.f32.mrf.mxu0
  %v259 = vadd.f32 %v224, %v258
  %260 = vmatmul.f32.gmra.mxu0 %v233
  %v261 = vpop.f32.mrf.mxu0
  %v262 = vadd.f32 %v224, %v261
  %263 = vmatmul.f32.gmra.mxu0 %v236
  %v264 = vpop.f32.mrf.mxu0
  %v265 = vadd.f32 %v224, %v264
  %266 = vdwg.mxu0
  %vm267 = vcmask 261120
  %v269 = vsel %vm267, %v216, 0
  %v272 = vsel %vm267, %v217, 0
  %v275 = vsel %vm267, %v218, 0
  %v278 = vsel %vm267, %v219, 0
  %280 = vmatpush.msra.mxu0 0.0
  %281 = vmatpush.msra.mxu0 0.0
  %282 = vmatpush.msra.mxu0 0.0
  %283 = vmatpush.msra.mxu0 0.0
  %284 = vmatpush.msra.mxu0 0.0
  %285 = vmatpush.msra.mxu0 0.0
  %286 = vmatpush.msra.mxu0 0.0
  %287 = vmatpush.msra.mxu0 0.0
  %288 = vmatpush.msra.mxu0 0.0
  %289 = vmatpush.msra.mxu0 0.0
  %290 = vmatpush.msra.mxu0 0.0
  %291 = vmatpush.msra.mxu0 0.0
  %292 = vmatpush.msra.mxu0 %v265
  %293 = vmatpush.msra.mxu0 %v262
  %294 = vmatpush.msra.mxu0 %v259
  %295 = vmatpush.msra.mxu0 %v256
  %296 = vmatmul.f32.gmra.mxu0 %v269
  %v297 = vpop.f32.mrf.mxu0
  %v298 = vadd.f32 0.0, %v297
  %299 = vmatmul.f32.gmra.mxu0 %v272
  %v300 = vpop.f32.mrf.mxu0
  %v301 = vadd.f32 0.0, %v300
  %302 = vmatmul.f32.gmra.mxu0 %v275
  %v303 = vpop.f32.mrf.mxu0
  %v304 = vadd.f32 0.0, %v303
  %305 = vmatmul.f32.gmra.mxu0 %v278
  %v306 = vpop.f32.mrf.mxu0
  %v307 = vadd.f32 0.0, %v306
  %308 = vdwg.mxu0
  %v309 = vmax.f32 %v298, 0.0
  %v310 = vmax.f32 %v301, 0.0
  %v311 = vmax.f32 %v304, 0.0
  %v312 = vmax.f32 %v307, 0.0
  %v313 = vsel %vm267, %v309, 0.0
  %v314 = vsel %vm267, %v310, 0.0
  %v315 = vadd.f32 %v313, %v314
  %v316 = vsel %vm267, %v311, 0.0
  %v317 = vadd.f32 %v315, %v316
  %v318 = vsel %vm267, %v312, 0.0
  %v319 = vadd.f32 %v317, %v318
  %v320 = vrot.slane %v319, 4
  %v321 = vadd.f32 %v319, %v320
  %v322 = vrot.slane %v321, 2
  %v323 = vadd.f32 %v321, %v322
  %v324 = vrot.slane %v323, 1
  %v325 = vadd.f32 %v323, %v324
  %v326 = vrcp.pop 32.0
  %v327 = vmul.f32 32.0, %v326
  %v328 = vsub.f32 1.0, %v327
  %v329 = vmul.f32 %v326, %v328
  %v330 = vadd.f32 %v326, %v329
  %vm331 = vweird.f32 %v326
  %v332 = vsel %vm331, %v326, %v330
  %v333 = vmul.f32 %v325, %v332
  %v334 = vsub.f32 %v309, %v333
  %v335 = vsub.f32 %v310, %v333
  %v336 = vsub.f32 %v311, %v333
  %v337 = vsub.f32 %v312, %v333
  %v338 = vmul.f32 %v334, %v334
  %v339 = vmul.f32 %v335, %v335
  %v340 = vmul.f32 %v336, %v336
  %v341 = vmul.f32 %v337, %v337
  %v342 = vsel %vm267, %v338, 0.0
  %v343 = vsel %vm267, %v339, 0.0
  %v344 = vadd.f32 %v342, %v343
  %v345 = vsel %vm267, %v340, 0.0
  %v346 = vadd.f32 %v344, %v345
  %v347 = vsel %vm267, %v341, 0.0
  %v348 = vadd.f32 %v346, %v347
  %v349 = vrot.slane %v348, 4
  %v350 = vadd.f32 %v348, %v349
  %v351 = vrot.slane %v350, 2
  %v352 = vadd.f32 %v350, %v351
  %v353 = vrot.slane %v352, 1
  %v354 = vadd.f32 %v352, %v353
  %v355 = vmul.f32 %v354, %v332
  %v356 = vadd.f32 %v355, 1e-05
  %v357 = vrsqrt.pop %v356
  %v358 = vmul.f32 %v357, %v356
  %v359 = vmul.f32 %v358, %v357
  %v360 = vmul.f32 0.5, %v359
  %v361 = vsub.f32 1.5, %v360
  %v362 = vmul.f32 %v357, %v361
  %vm363 = vweird.f32 %v356
  %vm364 = vweird.f32 %v357
  %vm365 = vmor %vm363, %vm364
  %v366 = vsel %vm365, %v357, %v362
  %v367 = vmul.f32 %v334, %v366
  %v368 = vmul.f32 %v335, %v366
  %v369 = vmul.f32 %v336, %v366
  %v370 = vmul.f32 %v337, %v366
  %v371 = vld [vmem:[%s11] sm:$0x1]
  %v373 = vperm.slane %v371, 0
  %v375 = vmul.f32 %v367, %v373
  %v376 = vmul.f32 %v368, %v373
  %v377 = vmul.f32 %v369, %v373
  %v378 = vmul.f32 %v370, %v373
  %v379 = vld [vmem:[%s12] sm:$0x1]
  %v381 = vperm.slane %v379, 0
  %v383 = vadd.f32 %v375, %v381
  %v384 = vadd.f32 %v376, %v381
  %v385 = vadd.f32 %v377, %v381
  %v386 = vadd.f32 %v378, %v381
  %v387 = vld [vmem:[%s7] sm:$0xff]
  %v388 = vld [vmem:[%s7 + $0x8] sm:$0xff]
  %v389 = vld [vmem:[%s7 + $0x10] sm:$0xff]
  %v390 = vld [vmem:[%s7 + $0x18] sm:$0xff]
  %v391 = vld [vmem:[%s8] sm:$0x1]
  %v393 = vperm.slane %v391, 0
  %v396 = vsel %vm267, %v383, 0
  %v399 = vsel %vm267, %v384, 0
  %v402 = vsel %vm267, %v385, 0
  %v405 = vsel %vm267, %v386, 0
  %407 = vmatpush.msra.mxu0 0.0
  %408 = vmatpush.msra.mxu0 0.0
  %409 = vmatpush.msra.mxu0 0.0
  %410 = vmatpush.msra.mxu0 0.0
  %411 = vmatpush.msra.mxu0 0.0
  %412 = vmatpush.msra.mxu0 0.0
  %413 = vmatpush.msra.mxu0 0.0
  %414 = vmatpush.msra.mxu0 0.0
  %415 = vmatpush.msra.mxu0 0.0
  %416 = vmatpush.msra.mxu0 0.0
  %417 = vmatpush.msra.mxu0 0.0
  %418 = vmatpush.msra.mxu0 0.0
  %419 = vmatpush.msra.mxu0 %v390
  %420 = vmatpush.msra.mxu0 %v389
  %421 = vmatpush.msra.mxu0 %v388
  %422 = vmatpush.msra.mxu0 %v387
  %423 = vmatmul.f32.gmra.mxu0 %v396
  %v424 = vpop.f32.mrf.mxu0
  %v425 = vadd.f32 %v393, %v424
  %426 = vmatmul.f32.gmra.mxu0 %v399
  %v427 = vpop.f32.mrf.mxu0
  %v428 = vadd.f32 %v393, %v427
  %429 = vmatmul.f32.gmra.mxu0 %v402
  %v430 = vpop.f32.mrf.mxu0
  %v431 = vadd.f32 %v393, %v430
  %432 = vmatmul.f32.gmra.mxu0 %v405
  %v433 = vpop.f32.mrf.mxu0
  %v434 = vadd.f32 %v393, %v433
  %435 = vdwg.mxu0
  %436 = vmatpush.msra.mxu0 0.0
  %437 = vmatpush.msra.mxu0 0.0
  %438 = vmatpush.msra.mxu0 0.0
  %439 = vmatpush.msra.mxu0 0.0
  %440 = vmatpush.msra.mxu0 0.0
  %441 = vmatpush.msra.mxu0 0.0
  %442 = vmatpush.msra.mxu0 0.0
  %443 = vmatpush.msra.mxu0 0.0
  %444 = vmatpush.msra.mxu0 0.0
  %445 = vmatpush.msra.mxu0 0.0
  %446 = vmatpush.msra.mxu0 0.0
  %447 = vmatpush.msra.mxu0 0.0
  %448 = vmatpush.msra.mxu0 %v434
  %449 = vmatpush.msra.mxu0 %v431
  %450 = vmatpush.msra.mxu0 %v428
  %451 = vmatpush.msra.mxu0 %v425
  %452 = vmatmul.f32.gmra.mxu0 %v269
  %v453 = vpop.f32.mrf.mxu0
  %v454 = vadd.f32 0.0, %v453
  %455 = vmatmul.f32.gmra.mxu0 %v272
  %v456 = vpop.f32.mrf.mxu0
  %v457 = vadd.f32 0.0, %v456
  %458 = vmatmul.f32.gmra.mxu0 %v275
  %v459 = vpop.f32.mrf.mxu0
  %v460 = vadd.f32 0.0, %v459
  %461 = vmatmul.f32.gmra.mxu0 %v278
  %v462 = vpop.f32.mrf.mxu0
  %v463 = vadd.f32 0.0, %v462
  %464 = vdwg.mxu0
  %465 = vxpose.xlu0.b32.start [1/16] %v454, 128
  %466 = vxpose.xlu0.b32.cont [2/16] %v457, 128
  %467 = vxpose.xlu0.b32.cont [3/16] %v460, 128
  %468 = vxpose.xlu0.b32.cont [4/16] %v463, 128
  %469 = vxpose.xlu0.b32.cont [5/16] 0.0, 128
  %470 = vxpose.xlu0.b32.cont [6/16] 0.0, 128
  %471 = vxpose.xlu0.b32.cont [7/16] 0.0, 128
  %472 = vxpose.xlu0.b32.cont [8/16] 0.0, 128
  %473 = vxpose.xlu0.b32.cont [9/16] 0.0, 128
  %474 = vxpose.xlu0.b32.cont [10/16] 0.0, 128
  %475 = vxpose.xlu0.b32.cont [11/16] 0.0, 128
  %476 = vxpose.xlu0.b32.cont [12/16] 0.0, 128
  %477 = vxpose.xlu0.b32.cont [13/16] 0.0, 128
  %478 = vxpose.xlu0.b32.cont [14/16] 0.0, 128
  %479 = vxpose.xlu0.b32.cont [15/16] 0.0, 128
  %480 = vxpose.xlu0.b32.end [16/16] 0.0, 128
  %v481 = vpop.trf.xlu0
  %v482 = vpop.trf.xlu0
  %v483 = vpop.trf.xlu0
  %v484 = vpop.trf.xlu0
  %v485 = vpop.trf.xlu0
  %v486 = vpop.trf.xlu0
  %v487 = vpop.trf.xlu0
  %v488 = vpop.trf.xlu0
  %v489 = vpop.trf.xlu0
  %v490 = vpop.trf.xlu0
  %v491 = vpop.trf.xlu0
  %v492 = vpop.trf.xlu0
  %v493 = vpop.trf.xlu0
  %v494 = vpop.trf.xlu0
  %v495 = vpop.trf.xlu0
  %v496 = vpop.trf.xlu0
  %497 = vst.msk [vmem:[%s13] sm:$0xff] %vm267, %v481
  // Predicated region
  $region54: #{hgnn_weight_forward.4} parent=0 // pred_check
    _
  $region55: #{hgnn_weight_forward.4} parent=0 // pred_check_branch
    %499 = sbr.rel (0) target = $region57
  $region56: #{hgnn_weight_forward.4} parent=0 // pred_region
    _
  $region57: #{hgnn_weight_forward.4} parent=0 // pred_fallthru
    _
  // Predicated region
  $region58: #{hgnn_weight_forward.4} parent=0 // pred_check
    _
  $region59: #{hgnn_weight_forward.4} parent=0 // pred_check_branch
    %501 = sbr.rel (0) target = $region61
  $region60: #{hgnn_weight_forward.4} parent=0 // pred_region
    _
  $region61: #{hgnn_weight_forward.4} parent=0 // pred_fallthru
    _

</llo_original>
